<compile_context>
chip_gen: v6e
topology: v6e:2x2x1
jax: 0.10.0
libtpu: 0.0.40
codegen_flags: <defaults>
</compile_context>

<pallas_src>
import functools

import jax
import jax.numpy as jnp
from jax.experimental import pallas as pl
from jax.experimental.pallas import tpu as pltpu

LMBDA = 0.1     # two-timescale coupling constant (static)
LANE = 128
SUBLANE = 8


def _round_up(x, m):
    return ((x + m - 1) // m) * m


def _vmem_capacity_bytes():
    """Physical VMEM of the current generation; conservative fallback."""
    try:
        info = pltpu.get_tpu_info()
        cap = getattr(info, "vmem_capacity_bytes", None)
        if cap:
            return int(cap)
    except Exception:
        pass
    return 64 << 20   # behave like the smallest (v7x) part if query fails


def _vmem_footprint(b_tile, d_pad, h_pad, c_pad, csize):
    """Estimated VMEM bytes for one kernel instance (inputs double-buffered)."""
    x = 2 * b_tile * d_pad * csize                       # x tile, 2 buffers
    t = 2 * b_tile * 4                                   # int32 targets
    w = 2 * ((d_pad * h_pad + h_pad * c_pad) * csize + h_pad * 4)  # weights
    acc = b_tile * c_pad * 4                             # f32 accumulator
    inter = b_tile * (2 * h_pad + 3 * c_pad) * 4         # h / pred / diff
    out = 2 * c_pad * 4
    return x + t + w + acc + inter + out


def _choose_b_tile(b, d_pad, h_pad, c_pad, csize, vmem_target, max_tile=2048):
    """Largest 128-aligned batch tile whose footprint fits the VMEM target."""
    resident = 2 * ((d_pad * h_pad + h_pad * c_pad) * csize + h_pad * 4)
    budget = vmem_target - resident - (4 << 20)
    per_row = (2 * (d_pad * csize + 4)          # double-buffered x + targets
               + c_pad * 4                      # accumulator
               + (2 * h_pad + 3 * c_pad) * 4)   # intermediates
    tile = budget // max(per_row, 1)
    tile = int(max(LANE, min(max_tile, tile)))
    tile = (tile // LANE) * LANE
    b_ceil = _round_up(max(b, 1), LANE)
    return max(LANE, min(tile, b_ceil))


def _two_timescale_kernel(b_actual, b_tile, n_chunks, tiles_per_core,
                          has_row_pad,
                          x_ref, t_ref, w1_ref, b1_ref, w2t_ref,
                          out_ref, acc_ref):
    # x_ref  : (b_tile, D_pad) f32/bf16     t_ref : (b_tile, 1) int32
    # w1_ref : (D_pad, H_pad)  f32/bf16     b1_ref: (1, H_pad)  f32
    # w2t_ref: (H_pad, C_pad)  f32/bf16 (pre-transposed outer weight, resident)
    # out_ref: (1, 1, C_pad) f32 per-core partial-SSE row
    # acc_ref: (b_tile, C_pad) f32 VMEM accumulator (persists across tiles)
    c = pl.program_id(0)
    i = pl.program_id(1)

    @pl.when(i == 0)
    def _():
        acc_ref[...] = jnp.zeros_like(acc_ref)

    w1 = w1_ref[...]
    b1 = b1_ref[...]
    w2t = w2t_ref[...]

    tile_row0 = (c * tiles_per_core + i) * b_tile
    needs_mask = tile_row0 + b_tile > b_actual     # runtime scalar, per tile

    rows = b_tile // n_chunks
    for ck in range(n_chunks):                     # static unroll: MXU/EUP overlap
        r0 = ck * rows
        x_ck = x_ref[r0:r0 + rows, :]
        # inner feature map: MXU matmul (f32 accumulate) + EUP tanh
        h = jnp.tanh(jnp.dot(x_ck, w1, preferred_element_type=jnp.float32) + b1)
        # outer linear layer, MXU-native (M,K)x(K,N): pred = h @ W_outer.T
        pred = jnp.dot(h.astype(w2t.dtype), w2t,
                       preferred_element_type=jnp.float32)   # (rows, C_pad)
        # one-hot folded into the subtraction; padded class columns (>= C)
        # never match any target.
        cls = jax.lax.broadcasted_iota(jnp.int32, pred.shape, 1)
        diff = jnp.where(cls == t_ref[r0:r0 + rows, :], pred - 1.0, pred)
        sq = diff * diff

        if has_row_pad:
            # only ragged / fully-padded tiles pay for the row mask
            @pl.when(jnp.logical_not(needs_mask))
            def _():
                acc_ref[r0:r0 + rows, :] += sq

            @pl.when(needs_mask)
            def _():
                row = (tile_row0 + r0
                       + jax.lax.broadcasted_iota(jnp.int32, sq.shape, 0))
                acc_ref[r0:r0 + rows, :] += jnp.where(row < b_actual, sq, 0.0)
        else:
            acc_ref[r0:r0 + rows, :] += sq

    @pl.when(i == pl.num_programs(1) - 1)
    def _():
        # one cross-sublane reduce per core group; lane-dense (1, C_pad) store
        out_ref[0] = jnp.sum(acc_ref[...], axis=0, keepdims=True)


def two_timescale_criterion(inputs, targets, w_inner, b_inner, w_outer,
                            num_classes, *, b_tile=None, use_bf16_matmul=True):
    """inputs: (B, D); targets: (B,) int; returns scalar f32 loss."""
    B, D = inputs.shape
    Dw, H = w_inner.shape
    C, Hw = w_outer.shape
    assert Dw == D and Hw == H and C == num_classes

    f32 = jnp.float32
    cdtype = jnp.bfloat16 if use_bf16_matmul else f32
    csize = 2 if use_bf16_matmul else 4

    # lane-pad model dims to 128 multiples (zero padding; means use true sizes)
    D_pad = _round_up(D, LANE)
    H_pad = _round_up(H, LANE)
    C_pad = _round_up(C, LANE)

    vmem_cap = _vmem_capacity_bytes()
    vmem_target = min(96 << 20, max(32 << 20, vmem_cap // 2))

    if b_tile is None:
        b_tile = _choose_b_tile(B, D_pad, H_pad, C_pad, csize, vmem_target)
    b_tile = max(LANE, _round_up(int(b_tile), LANE))

    num_tiles = -(-B // b_tile)
    core_groups = 2 if num_tiles >= 2 else 1      # v7x: 2 TCs; no-op elsewhere
    tiles_total = _round_up(num_tiles, core_groups)
    tiles_per_core = tiles_total // core_groups
    B_pad = tiles_total * b_tile
    has_row_pad = B < B_pad

    # pad / cast ONCE in the wrapper (skipped entirely when already aligned)
    if D == D_pad and B == B_pad and inputs.dtype == cdtype:
        x_p = inputs
    else:
        x_p = jnp.zeros((B_pad, D_pad), cdtype).at[:B, :D].set(
            inputs.astype(cdtype))

    t2 = targets.reshape(B, 1).astype(jnp.int32)
    t_p = t2 if B == B_pad else (
        jnp.zeros((B_pad, 1), jnp.int32).at[:B, :].set(t2))

    w1_p = jnp.zeros((D_pad, H_pad), cdtype).at[:D, :H].set(
        w_inner.astype(cdtype))
    b1_p = jnp.zeros((1, H_pad), f32).at[0, :H].set(b_inner.astype(f32))
    # pre-transpose the (static) outer weight once: (C, H) -> (H, C)
    w2t_p = jnp.zeros((H_pad, C_pad), cdtype).at[:H, :C].set(
        w_outer.astype(cdtype).T)

    n_chunks = 2 if (b_tile % (2 * SUBLANE)) == 0 else 1

    kernel = functools.partial(_two_timescale_kernel, B, b_tile, n_chunks,
                               tiles_per_core, has_row_pad)

    footprint = _vmem_footprint(b_tile, D_pad, H_pad, C_pad, csize)
    vmem_limit = int(min(max(vmem_cap - (8 << 20), 16 << 20),
                         max(vmem_target, footprint + (8 << 20))))

    flops = 2 * B_pad * D_pad * H_pad + 2 * B_pad * H_pad * C_pad
    bytes_accessed = (B_pad * D_pad * csize + B_pad * 4
                      + (D_pad * H_pad + H_pad * C_pad) * csize + H_pad * 4
                      + core_groups * C_pad * 4)
    cost = pl.CostEstimate(flops=flops, transcendentals=B_pad * H_pad,
                           bytes_accessed=bytes_accessed)

    partials = pl.pallas_call(
        kernel,
        out_shape=jax.ShapeDtypeStruct((core_groups, 1, C_pad), jnp.float32),
        grid_spec=pltpu.PrefetchScalarGridSpec(
            num_scalar_prefetch=0,
            grid=(core_groups, tiles_per_core),
            in_specs=[
                pl.BlockSpec((b_tile, D_pad),
                             lambda c, i: (c * tiles_per_core + i, 0)),  # x tile
                pl.BlockSpec((b_tile, 1),
                             lambda c, i: (c * tiles_per_core + i, 0)),  # targets
                pl.BlockSpec((D_pad, H_pad), lambda c, i: (0, 0)),   # W_inner (resident)
                pl.BlockSpec((1, H_pad), lambda c, i: (0, 0)),       # b_inner (resident)
                pl.BlockSpec((H_pad, C_pad), lambda c, i: (0, 0)),   # W_outer^T (resident)
            ],
            out_specs=pl.BlockSpec((1, 1, C_pad), lambda c, i: (c, 0, 0)),
            scratch_shapes=[pltpu.VMEM((b_tile, C_pad), jnp.float32)],
        ),
        compiler_params=pltpu.CompilerParams(
            dimension_semantics=("parallel", "arbitrary"),
            vmem_limit_bytes=vmem_limit,
        ),
        cost_estimate=cost,
    )(x_p, t_p, w1_p, b1_p, w2t_p)

    data_loss = 0.5 * jnp.sum(partials, dtype=jnp.float32) / (B * C * LMBDA)
    # regularization: mean(w_outer**2) over the ORIGINAL (C, H) weight, exact f32
    reg_loss = jnp.mean(w_outer.astype(f32) ** 2)
    return data_loss + reg_loss


def reference_loss(inputs, targets, w_inner, b_inner, w_outer, num_classes):
    t = jax.nn.one_hot(targets, num_classes, dtype=inputs.dtype)
    h = jnp.tanh(inputs @ w_inner + b_inner)
    pred = h @ w_outer.T
    data = 0.5 * jnp.mean((pred - t) ** 2) / LMBDA
    reg = jnp.mean(w_outer ** 2)
    return data + reg


if __name__ == "__main__":
    # B deliberately not a multiple of the tile so the ragged-tile mask, a
    # fully-padded trailing tile and the 2-way core split are all exercised.
    B, D, H, C = 300, 16, 32, 8

    key = jax.random.PRNGKey(0)
    k_x, k_t, k_w1, k_b1, k_w2 = jax.random.split(key, 5)

    x = jax.random.normal(k_x, (B, D), dtype=jnp.float32)
    targets = jax.random.randint(k_t, (B,), 0, C, dtype=jnp.int32)

    # deterministic synthetic "model" parameters
    w_inner = jax.random.normal(k_w1, (D, H), dtype=jnp.float32) * 0.1
    b_inner = jax.random.normal(k_b1, (H,), dtype=jnp.float32) * 0.05
    w_outer = jax.random.normal(k_w2, (C, H), dtype=jnp.float32) * 0.1

    ref = reference_loss(x, targets, w_inner, b_inner, w_outer, C)

    # default bf16-MXU path, auto tile (single tile, one core group)
    loss_bf16 = jax.block_until_ready(
        two_timescale_criterion(x, targets, w_inner, b_inner, w_outer, C))
    assert jnp.allclose(loss_bf16, ref, rtol=2e-2, atol=2e-2), (loss_bf16, ref)

    # default bf16 path, small tiles: 3 real tiles + 1 fully-padded tile,
    # split 2 x 2 across core groups (exercises masks + parallel axis)
    loss_bf16_t = jax.block_until_ready(
        two_timescale_criterion(x, targets, w_inner, b_inner, w_outer, C,
                                b_tile=128))
    assert jnp.allclose(loss_bf16_t, ref, rtol=2e-2, atol=2e-2), (loss_bf16_t, ref)

    # exact f32 fallback path, tight tolerance
    loss_f32 = jax.block_until_ready(
        two_timescale_criterion(x, targets, w_inner, b_inner, w_outer, C,
                                b_tile=128, use_bf16_matmul=False))
    assert jnp.allclose(loss_f32, ref, rtol=1e-5, atol=1e-5), (loss_f32, ref)

    print("KERNEL_OK")
</pallas_src>

<mosaic_0001>
module attributes {stable_mosaic.version = 11 : i64} {
  func.func @_two_timescale_kernel(%arg0: i32, %arg1: i32, %arg2: memref<384x128xbf16, #tpu.memory_space<vmem>>, %arg3: memref<384x1xi32, #tpu.memory_space<vmem>>, %arg4: memref<128x128xbf16, #tpu.memory_space<vmem>>, %arg5: memref<1x128xf32, #tpu.memory_space<vmem>>, %arg6: memref<128x128xbf16, #tpu.memory_space<vmem>>, %arg7: memref<1x1x128xf32, #tpu.memory_space<vmem>>, %arg8: memref<384x128xf32, #tpu.memory_space<vmem>>) attributes {dimension_semantics = [#tpu.dimension_semantics<parallel>, #tpu.dimension_semantics<arbitrary>], iteration_bounds = array<i64: 1, 1>, scalar_prefetch = 0 : i64, scratch_operands = 1 : i64, tpu.core_type = #tpu.core_type<tc>, window_params = [{transform_indices = @transform_0, window_bounds = array<i64: 384, 128>}, {transform_indices = @transform_1, window_bounds = array<i64: 384, 1>}, {pipeline_mode = #tpu.pipeline_mode<synchronous>, transform_indices = @transform_2, window_bounds = array<i64: 128, 128>}, {pipeline_mode = #tpu.pipeline_mode<synchronous>, transform_indices = @transform_3, window_bounds = array<i64: 1, 128>}, {pipeline_mode = #tpu.pipeline_mode<synchronous>, transform_indices = @transform_4, window_bounds = array<i64: 128, 128>}, {transform_indices = @transform_5, window_bounds = array<i64: 1, 1, 128>}]} {
    %c0_i32 = arith.constant 0 : i32
    %0 = arith.cmpi eq, %arg1, %c0_i32 : i32
    %1 = arith.extui %0 : i1 to i32
    %c0_i32_0 = arith.constant 0 : i32
    %2 = arith.cmpi ne, %1, %c0_i32_0 : i32
    scf.if %2 {
      %cst_26 = arith.constant 0.000000e+00 : f32
      %54 = vector.broadcast %cst_26 : f32 to vector<384x128xf32>
      %c0_27 = arith.constant 0 : index
      %c0_28 = arith.constant 0 : index
      %55 = vector.load %arg8[%c0_27, %c0_28] : memref<384x128xf32, #tpu.memory_space<vmem>>, vector<384x128xf32>
      tpu.vector_store %arg8[%c0_27, %c0_28], %54 {strides = array<i32>} : memref<384x128xf32, #tpu.memory_space<vmem>>, vector<384x128xf32>,
    } else {
    }
    %c0 = arith.constant 0 : index
    %c0_1 = arith.constant 0 : index
    %3 = vector.load %arg4[%c0, %c0_1] : memref<128x128xbf16, #tpu.memory_space<vmem>>, vector<128x128xbf16>
    %c0_2 = arith.constant 0 : index
    %c0_3 = arith.constant 0 : index
    %4 = vector.load %arg5[%c0_2, %c0_3] : memref<1x128xf32, #tpu.memory_space<vmem>>, vector<1x128xf32>
    %c0_4 = arith.constant 0 : index
    %c0_5 = arith.constant 0 : index
    %5 = vector.load %arg6[%c0_4, %c0_5] : memref<128x128xbf16, #tpu.memory_space<vmem>>, vector<128x128xbf16>
    %c1_i32 = arith.constant 1 : i32
    %6 = arith.muli %arg0, %c1_i32 : i32
    %7 = arith.addi %6, %arg1 : i32
    %c384_i32 = arith.constant 384 : i32
    %8 = arith.muli %7, %c384_i32 : i32
    %c384_i32_6 = arith.constant 384 : i32
    %9 = arith.addi %8, %c384_i32_6 : i32
    %c300_i32 = arith.constant 300 : i32
    %10 = arith.cmpi sgt, %9, %c300_i32 : i32
    %c0_7 = arith.constant 0 : index
    %c0_8 = arith.constant 0 : index
    %11 = vector.load %arg2[%c0_7, %c0_8] : memref<384x128xbf16, #tpu.memory_space<vmem>>, vector<192x128xbf16>
    %cst = arith.constant dense<0.000000e+00> : vector<192x128xf32>
    %12 = tpu.matmul %11, %3, %cst {dimension_numbers = #tpu.dot_dimension_numbers<[1], [0], [0], [1], [0, 0, 1, 1], [], []>} : vector<192x128xbf16>, vector<128x128xbf16>, vector<192x128xf32> -> vector<192x128xf32>
    %13 = vector.broadcast %4 : vector<1x128xf32> to vector<192x128xf32>
    %14 = arith.addf %12, %13 : vector<192x128xf32>
    %15 = math.tanh %14 : vector<192x128xf32>
    %16 = arith.truncf %15 : vector<192x128xf32> to vector<192x128xbf16>
    %cst_9 = arith.constant dense<0.000000e+00> : vector<192x128xf32>
    %17 = tpu.matmul %16, %5, %cst_9 {dimension_numbers = #tpu.dot_dimension_numbers<[1], [0], [0], [1], [0, 0, 1, 1], [], []>} : vector<192x128xbf16>, vector<128x128xbf16>, vector<192x128xf32> -> vector<192x128xf32>
    %18 = tpu.iota {dimensions = array<i32: 1>} : vector<192x128xi32>
    %c0_10 = arith.constant 0 : index
    %c0_11 = arith.constant 0 : index
    %19 = vector.load %arg3[%c0_10, %c0_11] : memref<384x1xi32, #tpu.memory_space<vmem>>, vector<192x1xi32>
    %20 = vector.broadcast %19 : vector<192x1xi32> to vector<192x128xi32>
    %21 = arith.cmpi eq, %18, %20 : vector<192x128xi32>
    %cst_12 = arith.constant 1.000000e+00 : f32
    %22 = vector.broadcast %cst_12 : f32 to vector<192x128xf32>
    %23 = arith.subf %17, %22 : vector<192x128xf32>
    %24 = arith.select %21, %23, %17 : vector<192x128xi1>, vector<192x128xf32>
    %25 = arith.mulf %24, %24 : vector<192x128xf32>
    %true = arith.constant true
    %26 = arith.xori %10, %true : i1
    %27 = arith.extui %26 : i1 to i32
    %c0_i32_13 = arith.constant 0 : i32
    %28 = arith.cmpi ne, %27, %c0_i32_13 : i32
    scf.if %28 {
      %c0_26 = arith.constant 0 : index
      %c0_27 = arith.constant 0 : index
      %54 = vector.load %arg8[%c0_26, %c0_27] : memref<384x128xf32, #tpu.memory_space<vmem>>, vector<192x128xf32>
      %55 = arith.addf %54, %25 : vector<192x128xf32>
      %c0_28 = arith.constant 0 : index
      %c0_29 = arith.constant 0 : index
      %56 = vector.load %arg8[%c0_28, %c0_29] : memref<384x128xf32, #tpu.memory_space<vmem>>, vector<192x128xf32>
      tpu.vector_store %arg8[%c0_28, %c0_29], %55 {strides = array<i32>} : memref<384x128xf32, #tpu.memory_space<vmem>>, vector<192x128xf32>,
    } else {
    }
    %29 = arith.extui %10 : i1 to i32
    %c0_i32_14 = arith.constant 0 : i32
    %30 = arith.cmpi ne, %29, %c0_i32_14 : i32
    scf.if %30 {
      %c0_i32_26 = arith.constant 0 : i32
      %54 = arith.addi %8, %c0_i32_26 : i32
      %55 = tpu.iota {dimensions = array<i32: 0>} : vector<192x128xi32>
      %56 = vector.broadcast %54 : i32 to vector<192x128xi32>
      %57 = arith.addi %56, %55 : vector<192x128xi32>
      %c0_27 = arith.constant 0 : index
      %c0_28 = arith.constant 0 : index
      %58 = vector.load %arg8[%c0_27, %c0_28] : memref<384x128xf32, #tpu.memory_space<vmem>>, vector<192x128xf32>
      %c300_i32_29 = arith.constant 300 : i32
      %59 = vector.broadcast %c300_i32_29 : i32 to vector<192x128xi32>
      %60 = arith.cmpi slt, %57, %59 : vector<192x128xi32>
      %cst_30 = arith.constant 0.000000e+00 : f32
      %61 = vector.broadcast %cst_30 : f32 to vector<192x128xf32>
      %62 = arith.select %60, %25, %61 : vector<192x128xi1>, vector<192x128xf32>
      %63 = arith.addf %58, %62 : vector<192x128xf32>
      %c0_31 = arith.constant 0 : index
      %c0_32 = arith.constant 0 : index
      %64 = vector.load %arg8[%c0_31, %c0_32] : memref<384x128xf32, #tpu.memory_space<vmem>>, vector<192x128xf32>
      tpu.vector_store %arg8[%c0_31, %c0_32], %63 {strides = array<i32>} : memref<384x128xf32, #tpu.memory_space<vmem>>, vector<192x128xf32>,
    } else {
    }
    %c192 = arith.constant 192 : index
    %c0_15 = arith.constant 0 : index
    %31 = vector.load %arg2[%c192, %c0_15] : memref<384x128xbf16, #tpu.memory_space<vmem>>, vector<192x128xbf16>
    %cst_16 = arith.constant dense<0.000000e+00> : vector<192x128xf32>
    %32 = tpu.matmul %31, %3, %cst_16 {dimension_numbers = #tpu.dot_dimension_numbers<[1], [0], [0], [1], [0, 0, 1, 1], [], []>} : vector<192x128xbf16>, vector<128x128xbf16>, vector<192x128xf32> -> vector<192x128xf32>
    %33 = vector.broadcast %4 : vector<1x128xf32> to vector<192x128xf32>
    %34 = arith.addf %32, %33 : vector<192x128xf32>
    %35 = math.tanh %34 : vector<192x128xf32>
    %36 = arith.truncf %35 : vector<192x128xf32> to vector<192x128xbf16>
    %cst_17 = arith.constant dense<0.000000e+00> : vector<192x128xf32>
    %37 = tpu.matmul %36, %5, %cst_17 {dimension_numbers = #tpu.dot_dimension_numbers<[1], [0], [0], [1], [0, 0, 1, 1], [], []>} : vector<192x128xbf16>, vector<128x128xbf16>, vector<192x128xf32> -> vector<192x128xf32>
    %38 = tpu.iota {dimensions = array<i32: 1>} : vector<192x128xi32>
    %c192_18 = arith.constant 192 : index
    %c0_19 = arith.constant 0 : index
    %39 = vector.load %arg3[%c192_18, %c0_19] : memref<384x1xi32, #tpu.memory_space<vmem>>, vector<192x1xi32>
    %40 = vector.broadcast %39 : vector<192x1xi32> to vector<192x128xi32>
    %41 = arith.cmpi eq, %38, %40 : vector<192x128xi32>
    %cst_20 = arith.constant 1.000000e+00 : f32
    %42 = vector.broadcast %cst_20 : f32 to vector<192x128xf32>
    %43 = arith.subf %37, %42 : vector<192x128xf32>
    %44 = arith.select %41, %43, %37 : vector<192x128xi1>, vector<192x128xf32>
    %45 = arith.mulf %44, %44 : vector<192x128xf32>
    %true_21 = arith.constant true
    %46 = arith.xori %10, %true_21 : i1
    %47 = arith.extui %46 : i1 to i32
    %c0_i32_22 = arith.constant 0 : i32
    %48 = arith.cmpi ne, %47, %c0_i32_22 : i32
    scf.if %48 {
      %c192_26 = arith.constant 192 : index
      %c0_27 = arith.constant 0 : index
      %54 = vector.load %arg8[%c192_26, %c0_27] : memref<384x128xf32, #tpu.memory_space<vmem>>, vector<192x128xf32>
      %55 = arith.addf %54, %45 : vector<192x128xf32>
      %c192_28 = arith.constant 192 : index
      %c0_29 = arith.constant 0 : index
      %56 = vector.load %arg8[%c192_28, %c0_29] : memref<384x128xf32, #tpu.memory_space<vmem>>, vector<192x128xf32>
      tpu.vector_store %arg8[%c192_28, %c0_29], %55 {strides = array<i32>} : memref<384x128xf32, #tpu.memory_space<vmem>>, vector<192x128xf32>,
    } else {
    }
    %49 = arith.extui %10 : i1 to i32
    %c0_i32_23 = arith.constant 0 : i32
    %50 = arith.cmpi ne, %49, %c0_i32_23 : i32
    scf.if %50 {
      %c192_i32 = arith.constant 192 : i32
      %54 = arith.addi %8, %c192_i32 : i32
      %55 = tpu.iota {dimensions = array<i32: 0>} : vector<192x128xi32>
      %56 = vector.broadcast %54 : i32 to vector<192x128xi32>
      %57 = arith.addi %56, %55 : vector<192x128xi32>
      %c192_26 = arith.constant 192 : index
      %c0_27 = arith.constant 0 : index
      %58 = vector.load %arg8[%c192_26, %c0_27] : memref<384x128xf32, #tpu.memory_space<vmem>>, vector<192x128xf32>
      %c300_i32_28 = arith.constant 300 : i32
      %59 = vector.broadcast %c300_i32_28 : i32 to vector<192x128xi32>
      %60 = arith.cmpi slt, %57, %59 : vector<192x128xi32>
      %cst_29 = arith.constant 0.000000e+00 : f32
      %61 = vector.broadcast %cst_29 : f32 to vector<192x128xf32>
      %62 = arith.select %60, %45, %61 : vector<192x128xi1>, vector<192x128xf32>
      %63 = arith.addf %58, %62 : vector<192x128xf32>
      %c192_30 = arith.constant 192 : index
      %c0_31 = arith.constant 0 : index
      %64 = vector.load %arg8[%c192_30, %c0_31] : memref<384x128xf32, #tpu.memory_space<vmem>>, vector<192x128xf32>
      tpu.vector_store %arg8[%c192_30, %c0_31], %63 {strides = array<i32>} : memref<384x128xf32, #tpu.memory_space<vmem>>, vector<192x128xf32>,
    } else {
    }
    %c0_i32_24 = arith.constant 0 : i32
    %51 = arith.cmpi eq, %arg1, %c0_i32_24 : i32
    %52 = arith.extui %51 : i1 to i32
    %c0_i32_25 = arith.constant 0 : i32
    %53 = arith.cmpi ne, %52, %c0_i32_25 : i32
    scf.if %53 {
      %c0_26 = arith.constant 0 : index
      %c0_27 = arith.constant 0 : index
      %54 = vector.load %arg8[%c0_26, %c0_27] : memref<384x128xf32, #tpu.memory_space<vmem>>, vector<384x128xf32>
      %cst_28 = arith.constant dense<0.000000e+00> : vector<128xf32>
      %55 = vector.multi_reduction <add>, %54, %cst_28 [0] : vector<384x128xf32> to vector<128xf32>
      %56 = vector.shape_cast %55 : vector<128xf32> to vector<1x128xf32>
      %c0_29 = arith.constant 0 : index
      %c0_30 = arith.constant 0 : index
      %c0_31 = arith.constant 0 : index
      %57 = vector.load %arg7[%c0_29, %c0_30, %c0_31] : memref<1x1x128xf32, #tpu.memory_space<vmem>>, vector<1x1x128xf32>
      %58 = vector.shape_cast %57 : vector<1x1x128xf32> to vector<1x128xf32>
      %59 = vector.shape_cast %56 : vector<1x128xf32> to vector<1x1x128xf32>
      tpu.vector_store %arg7[%c0_29, %c0_30, %c0_31], %59 {strides = array<i32>} : memref<1x1x128xf32, #tpu.memory_space<vmem>>, vector<1x1x128xf32>,
    } else {
    }
    return
  }
  func.func @transform_0(%arg0: i32, %arg1: i32) -> (i32, i32) {
    %c1_i32 = arith.constant 1 : i32
    %0 = arith.muli %arg0, %c1_i32 : i32
    %1 = arith.addi %0, %arg1 : i32
    %c0_i32 = arith.constant 0 : i32
    %c0_i32_0 = arith.constant 0 : i32
    return %1, %c0_i32 : i32, i32
  }
  func.func @transform_1(%arg0: i32, %arg1: i32) -> (i32, i32) {
    %c1_i32 = arith.constant 1 : i32
    %0 = arith.muli %arg0, %c1_i32 : i32
    %1 = arith.addi %0, %arg1 : i32
    %c0_i32 = arith.constant 0 : i32
    %c0_i32_0 = arith.constant 0 : i32
    return %1, %c0_i32 : i32, i32
  }
  func.func @transform_2(%arg0: i32, %arg1: i32) -> (i32, i32) {
    %c0_i32 = arith.constant 0 : i32
    %c0_i32_0 = arith.constant 0 : i32
    %c0_i32_1 = arith.constant 0 : i32
    return %c0_i32, %c0_i32_0 : i32, i32
  }
  func.func @transform_3(%arg0: i32, %arg1: i32) -> (i32, i32) {
    %c0_i32 = arith.constant 0 : i32
    %c0_i32_0 = arith.constant 0 : i32
    %c0_i32_1 = arith.constant 0 : i32
    return %c0_i32, %c0_i32_0 : i32, i32
  }
  func.func @transform_4(%arg0: i32, %arg1: i32) -> (i32, i32) {
    %c0_i32 = arith.constant 0 : i32
    %c0_i32_0 = arith.constant 0 : i32
    %c0_i32_1 = arith.constant 0 : i32
    return %c0_i32, %c0_i32_0 : i32, i32
  }
  func.func @transform_5(%arg0: i32, %arg1: i32) -> (i32, i32, i32) {
    %c0_i32 = arith.constant 0 : i32
    %c0_i32_0 = arith.constant 0 : i32
    %c0_i32_1 = arith.constant 0 : i32
    return %arg0, %c0_i32, %c0_i32_0 : i32, i32, i32
  }
}

</mosaic_0001>

<llo_original>
// kernel: tpu_custom_call.1
$region0: #{tpu_custom_call.1}
  #allocation0 [shape = 'u32[]', space=smem, size = 0x4, offset = 0x4, fixed_abs, tag = 'smem constant byte address 0x4 - core index']
  #allocation1 [shape = 'u32[144,128]{1,0:T(1,128)}', space=vmem, size = 0x12000, scoped, tag = 'internal scratch']
  #allocation2 [shape = 'f32[384,128]{1,0:T(8,128)}', space=vmem, size = 0x30000, scoped, tag = 'scratch operand']
  %s0 = inlined_call_operand.vmem [shape: bf16[384,128], index: 0, kind: input, shape index: {}]
  %s1 = inlined_call_operand.vmem [shape: s32[384,1], index: 1, kind: input, shape index: {}]
  %s2 = inlined_call_operand.vmem [shape: bf16[128,128], index: 2, kind: input, shape index: {}]
  %s3 = inlined_call_operand.vmem [shape: f32[1,128], index: 3, kind: input, shape index: {}]
  %s4 = inlined_call_operand.vmem [shape: bf16[128,128], index: 4, kind: input, shape index: {}]
  %s5 = inlined_call_operand.hbm [shape: f32[1,1,128], index: 5, kind: output, shape index: {}]
  %s6 = sld [smem:[#allocation0]]
  $region54: #{tpu_custom_call.1} parent=0
    _
  %s8 = ssub.s32 1, %s6
  %s9 = scalar_select 0, %s8, %s6
  $region1: #{tpu_custom_call.1} parent=0
    #allocation3 [shape = 'u8[512]{0}', space=vmem, size = 0x400, scoped, tag = 'output window, operand 0, single buffered']
    #allocation4 [shape = 's32[1]{0}', space=sflag, size = 0x4, scoped, tag = 'scoped memory for tpu_custom_call.1']
    %10 = vsyncpa [#allocation4], 0
    // Predicated region
    $region2: #{tpu_custom_call.1} parent=1 // pred_check
      _
    $region3: #{tpu_custom_call.1} parent=1 // pred_check_branch
      %12 = sbr.rel (0) target = $region5
    $region4: #{tpu_custom_call.1} parent=1 // pred_region
      %s13 = sadd.s32 0, 0
      %s14 = smul.u32 48, %s13
      %p15 = scmp.lt.s32.totalorder %s14, 47
      %s16 = scalar_select %p15, %s14, 47
      %s17 = smul.addr %s16, 4
      %s18 = scalar_lea.vmem %s0, %s17
      %s19 = sadd.s32 0, 0
      %s20 = smul.u32 48, %s19
    $region5: #{tpu_custom_call.1} parent=1 // pred_fallthru
      _
    // Predicated region
    $region6: #{tpu_custom_call.1} parent=1 // pred_check
      _
    $region7: #{tpu_custom_call.1} parent=1 // pred_check_branch
      %22 = sbr.rel (0) target = $region9
    $region8: #{tpu_custom_call.1} parent=1 // pred_region
      %s23 = sadd.s32 0, 0
      %s24 = smul.u32 48, %s23
      %p25 = scmp.lt.s32.totalorder %s24, 47
      %s26 = scalar_select %p25, %s24, 47
      %s27 = smul.addr %s26, 8
      %s28 = scalar_lea.vmem %s1, %s27
      %s29 = sadd.s32 0, 0
      %s30 = smul.u32 48, %s29
    $region9: #{tpu_custom_call.1} parent=1 // pred_fallthru
      _
    // Predicated region
    $region10: #{tpu_custom_call.1} parent=1 // pred_check
      _
    $region11: #{tpu_custom_call.1} parent=1 // pred_check_branch
      %32 = sbr.rel (0) target = $region13
    $region12: #{tpu_custom_call.1} parent=1 // pred_region
      _
    $region13: #{tpu_custom_call.1} parent=1 // pred_fallthru
      _
    // Predicated region
    $region14: #{tpu_custom_call.1} parent=1 // pred_check
      _
    $region15: #{tpu_custom_call.1} parent=1 // pred_check_branch
      %34 = sbr.rel (0) target = $region17
    $region16: #{tpu_custom_call.1} parent=1 // pred_region
      _
    $region17: #{tpu_custom_call.1} parent=1 // pred_fallthru
      _
    // Predicated region
    $region18: #{tpu_custom_call.1} parent=1 // pred_check
      _
    $region19: #{tpu_custom_call.1} parent=1 // pred_check_branch
      %36 = sbr.rel (0) target = $region21
    $region20: #{tpu_custom_call.1} parent=1 // pred_region
      _
    $region21: #{tpu_custom_call.1} parent=1 // pred_fallthru
      _
    %s37 = sadd.s32 0, 0
    %s38 = smul.u32 48, %s37
    %p39 = scmp.lt.s32.totalorder %s38, 47
    %s40 = scalar_select %p39, %s38, 47
    %s41 = smul.addr %s40, 4
    %s42 = scalar_lea.vmem %s0, %s41
    %s43 = sadd.s32 0, 0
    %s44 = smul.u32 48, %s43
    %p45 = scmp.lt.s32.totalorder %s44, 47
    %s46 = scalar_select %p45, %s44, 47
    %s47 = smul.addr %s46, 8
    %s48 = scalar_lea.vmem %s1, %s47
    %s49 = sadd.s32 0, 0
    %s50 = smul.u32 48, %s49
    %p51 = scmp.lt.s32.totalorder %s50, 47
    %s52 = scalar_select %p51, %s50, 47
    %s53 = smul.addr %s52, 4
    %s54 = scalar_lea.vmem %s0, %s53
    %s55 = sadd.s32 0, 0
    %s56 = smul.u32 48, %s55
    %s57 = sadd.s32 0, 0
    %s58 = smul.u32 48, %s57
    %p59 = scmp.lt.s32.totalorder %s58, 47
    %s60 = scalar_select %p59, %s58, 47
    %s61 = smul.addr %s60, 8
    %s62 = scalar_lea.vmem %s1, %s61
    %s63 = sadd.s32 0, 0
    %s64 = smul.u32 48, %s63
    %p66 = scmp.eq.s32.totalorder 0, 0
    // Predicated region
    $region22: #{tpu_custom_call.1} parent=1 // pred_check
      %p67 = pneg %p66
    $region23: #{tpu_custom_call.1} parent=1 // pred_check_branch
      %69 = sbr.rel (%p67) target = $region25
    $region24: #{tpu_custom_call.1} parent=1 // pred_region
      %70 = vst [vmem:[#allocation2] sm:$0xff] 0.0
      %71 = vst [vmem:[#allocation2 + $0x8] sm:$0xff] 0.0
      %72 = vst [vmem:[#allocation2 + $0x10] sm:$0xff] 0.0
      %73 = vst [vmem:[#allocation2 + $0x18] sm:$0xff] 0.0
      %74 = vst [vmem:[#allocation2 + $0x20] sm:$0xff] 0.0
      %75 = vst [vmem:[#allocation2 + $0x28] sm:$0xff] 0.0
      %76 = vst [vmem:[#allocation2 + $0x30] sm:$0xff] 0.0
      %77 = vst [vmem:[#allocation2 + $0x38] sm:$0xff] 0.0
      %78 = vst [vmem:[#allocation2 + $0x40] sm:$0xff] 0.0
      %79 = vst [vmem:[#allocation2 + $0x48] sm:$0xff] 0.0
      %80 = vst [vmem:[#allocation2 + $0x50] sm:$0xff] 0.0
      %81 = vst [vmem:[#allocation2 + $0x58] sm:$0xff] 0.0
      %82 = vst [vmem:[#allocation2 + $0x60] sm:$0xff] 0.0
      %83 = vst [vmem:[#allocation2 + $0x68] sm:$0xff] 0.0
      %84 = vst [vmem:[#allocation2 + $0x70] sm:$0xff] 0.0
      %85 = vst [vmem:[#allocation2 + $0x78] sm:$0xff] 0.0
      %86 = vst [vmem:[#allocation2 + $0x80] sm:$0xff] 0.0
      %87 = vst [vmem:[#allocation2 + $0x88] sm:$0xff] 0.0
      %88 = vst [vmem:[#allocation2 + $0x90] sm:$0xff] 0.0
      %89 = vst [vmem:[#allocation2 + $0x98] sm:$0xff] 0.0
      %90 = vst [vmem:[#allocation2 + $0xa0] sm:$0xff] 0.0
      %91 = vst [vmem:[#allocation2 + $0xa8] sm:$0xff] 0.0
      %92 = vst [vmem:[#allocation2 + $0xb0] sm:$0xff] 0.0
      %93 = vst [vmem:[#allocation2 + $0xb8] sm:$0xff] 0.0
      %94 = vst [vmem:[#allocation2 + $0xc0] sm:$0xff] 0.0
      %95 = vst [vmem:[#allocation2 + $0xc8] sm:$0xff] 0.0
      %96 = vst [vmem:[#allocation2 + $0xd0] sm:$0xff] 0.0
      %97 = vst [vmem:[#allocation2 + $0xd8] sm:$0xff] 0.0
      %98 = vst [vmem:[#allocation2 + $0xe0] sm:$0xff] 0.0
      %99 = vst [vmem:[#allocation2 + $0xe8] sm:$0xff] 0.0
      %100 = vst [vmem:[#allocation2 + $0xf0] sm:$0xff] 0.0
      %101 = vst [vmem:[#allocation2 + $0xf8] sm:$0xff] 0.0
      %102 = vst [vmem:[#allocation2 + $0x100] sm:$0xff] 0.0
      %103 = vst [vmem:[#allocation2 + $0x108] sm:$0xff] 0.0
      %104 = vst [vmem:[#allocation2 + $0x110] sm:$0xff] 0.0
      %105 = vst [vmem:[#allocation2 + $0x118] sm:$0xff] 0.0
      %106 = vst [vmem:[#allocation2 + $0x120] sm:$0xff] 0.0
      %107 = vst [vmem:[#allocation2 + $0x128] sm:$0xff] 0.0
      %108 = vst [vmem:[#allocation2 + $0x130] sm:$0xff] 0.0
      %109 = vst [vmem:[#allocation2 + $0x138] sm:$0xff] 0.0
      %110 = vst [vmem:[#allocation2 + $0x140] sm:$0xff] 0.0
      %111 = vst [vmem:[#allocation2 + $0x148] sm:$0xff] 0.0
      %112 = vst [vmem:[#allocation2 + $0x150] sm:$0xff] 0.0
      %113 = vst [vmem:[#allocation2 + $0x158] sm:$0xff] 0.0
      %114 = vst [vmem:[#allocation2 + $0x160] sm:$0xff] 0.0
      %115 = vst [vmem:[#allocation2 + $0x168] sm:$0xff] 0.0
      %116 = vst [vmem:[#allocation2 + $0x170] sm:$0xff] 0.0
      %117 = vst [vmem:[#allocation2 + $0x178] sm:$0xff] 0.0
    $region25: #{tpu_custom_call.1} parent=1 // pred_fallthru
      _
    %v118 = vld [vmem:[%s2] sm:$0xf]
    %v119 = vld [vmem:[%s2 + $0x4] sm:$0xf]
    %v120 = vld [vmem:[%s2 + $0x8] sm:$0xf]
    %v121 = vld [vmem:[%s2 + $0xc] sm:$0xf]
    %v122 = vld [vmem:[%s2 + $0x10] sm:$0xf]
    %v123 = vld [vmem:[%s2 + $0x14] sm:$0xf]
    %v124 = vld [vmem:[%s2 + $0x18] sm:$0xf]
    %v125 = vld [vmem:[%s2 + $0x1c] sm:$0xf]
    %v126 = vld [vmem:[%s2 + $0x20] sm:$0xf]
    %v127 = vld [vmem:[%s2 + $0x24] sm:$0xf]
    %v128 = vld [vmem:[%s2 + $0x28] sm:$0xf]
    %v129 = vld [vmem:[%s2 + $0x2c] sm:$0xf]
    %v130 = vld [vmem:[%s2 + $0x30] sm:$0xf]
    %v131 = vld [vmem:[%s2 + $0x34] sm:$0xf]
    %v132 = vld [vmem:[%s2 + $0x38] sm:$0xf]
    %v133 = vld [vmem:[%s2 + $0x3c] sm:$0xf]
    %v134 = vld [vmem:[%s3] sm:$0x1]
    %v135 = vld [vmem:[%s4] sm:$0xf]
    %v136 = vld [vmem:[%s4 + $0x4] sm:$0xf]
    %v137 = vld [vmem:[%s4 + $0x8] sm:$0xf]
    %v138 = vld [vmem:[%s4 + $0xc] sm:$0xf]
    %v139 = vld [vmem:[%s4 + $0x10] sm:$0xf]
    %v140 = vld [vmem:[%s4 + $0x14] sm:$0xf]
    %v141 = vld [vmem:[%s4 + $0x18] sm:$0xf]
    %v142 = vld [vmem:[%s4 + $0x1c] sm:$0xf]
    %v143 = vld [vmem:[%s4 + $0x20] sm:$0xf]
    %v144 = vld [vmem:[%s4 + $0x24] sm:$0xf]
    %v145 = vld [vmem:[%s4 + $0x28] sm:$0xf]
    %v146 = vld [vmem:[%s4 + $0x2c] sm:$0xf]
    %v147 = vld [vmem:[%s4 + $0x30] sm:$0xf]
    %v148 = vld [vmem:[%s4 + $0x34] sm:$0xf]
    %v149 = vld [vmem:[%s4 + $0x38] sm:$0xf]
    %v150 = vld [vmem:[%s4 + $0x3c] sm:$0xf]
    %s151 = sadd.s32 0, 0
    %s152 = smul.u32 %s151, 384
    %s153 = sadd.s32 %s152, 384
    %p154 = scmp.gt.s32.totalorder %s153, 300
    %v155 = vld [vmem:[%s54] sm:$0xf]
    %v156 = vld [vmem:[%s54 + $0x4] sm:$0xf]
    %v157 = vld [vmem:[%s54 + $0x8] sm:$0xf]
    %v158 = vld [vmem:[%s54 + $0xc] sm:$0xf]
    %v159 = vld [vmem:[%s54 + $0x10] sm:$0xf]
    %v160 = vld [vmem:[%s54 + $0x14] sm:$0xf]
    %v161 = vld [vmem:[%s54 + $0x18] sm:$0xf]
    %v162 = vld [vmem:[%s54 + $0x1c] sm:$0xf]
    %v163 = vld [vmem:[%s54 + $0x20] sm:$0xf]
    %v164 = vld [vmem:[%s54 + $0x24] sm:$0xf]
    %v165 = vld [vmem:[%s54 + $0x28] sm:$0xf]
    %v166 = vld [vmem:[%s54 + $0x2c] sm:$0xf]
    %v167 = vld [vmem:[%s54 + $0x30] sm:$0xf]
    %v168 = vld [vmem:[%s54 + $0x34] sm:$0xf]
    %v169 = vld [vmem:[%s54 + $0x38] sm:$0xf]
    %v170 = vld [vmem:[%s54 + $0x3c] sm:$0xf]
    %v171 = vld [vmem:[%s54 + $0x40] sm:$0xf]
    %v172 = vld [vmem:[%s54 + $0x44] sm:$0xf]
    %v173 = vld [vmem:[%s54 + $0x48] sm:$0xf]
    %v174 = vld [vmem:[%s54 + $0x4c] sm:$0xf]
    %v175 = vld [vmem:[%s54 + $0x50] sm:$0xf]
    %v176 = vld [vmem:[%s54 + $0x54] sm:$0xf]
    %v177 = vld [vmem:[%s54 + $0x58] sm:$0xf]
    %v178 = vld [vmem:[%s54 + $0x5c] sm:$0xf]
    %v180 = vlaneseq
    %v181 = vshrl.u32 %v180, 7
    %v182 = vsub.s32 0, %v181
    %v183 = vrot.slane %v134, %v182
    %v209 = vunpack.c.l.b16 %v155
    %v210 = vunpack.c.l.b16 %v156
    %v211 = vunpack.c.l.b16 %v157
    %v212 = vunpack.c.l.b16 %v158
    %v213 = vunpack.c.l.b16 %v159
    %v214 = vunpack.c.l.b16 %v160
    %v215 = vunpack.c.l.b16 %v161
    %v216 = vunpack.c.l.b16 %v162
    %v217 = vunpack.c.l.b16 %v163
    %v218 = vunpack.c.l.b16 %v164
    %v219 = vunpack.c.l.b16 %v165
    %v220 = vunpack.c.l.b16 %v166
    %v221 = vunpack.c.l.b16 %v167
    %v222 = vunpack.c.l.b16 %v168
    %v223 = vunpack.c.l.b16 %v169
    %v224 = vunpack.c.l.b16 %v170
    %v225 = vunpack.c.l.b16 %v171
    %v226 = vunpack.c.l.b16 %v172
    %v227 = vunpack.c.l.b16 %v173
    %v228 = vunpack.c.l.b16 %v174
    %v229 = vunpack.c.l.b16 %v175
    %v230 = vunpack.c.l.b16 %v176
    %v231 = vunpack.c.l.b16 %v177
    %v232 = vunpack.c.l.b16 %v178
    %v233 = vpack.c.b16 %v210, %v209
    %v234 = vpack.c.b16 %v212, %v211
    %v235 = vpack.c.b16 %v214, %v213
    %v236 = vpack.c.b16 %v216, %v215
    %v237 = vpack.c.b16 %v218, %v217
    %v238 = vpack.c.b16 %v220, %v219
    %v239 = vpack.c.b16 %v222, %v221
    %v240 = vpack.c.b16 %v224, %v223
    %v241 = vpack.c.b16 %v226, %v225
    %v242 = vpack.c.b16 %v228, %v227
    %v243 = vpack.c.b16 %v230, %v229
    %v244 = vpack.c.b16 %v232, %v231
    %v273 = vunpack.c.l.b16 %v118
    %v274 = vunpack.c.l.b16 %v119
    %v275 = vunpack.c.l.b16 %v120
    %v276 = vunpack.c.l.b16 %v121
    %v277 = vunpack.c.l.b16 %v122
    %v278 = vunpack.c.l.b16 %v123
    %v279 = vunpack.c.l.b16 %v124
    %v280 = vunpack.c.l.b16 %v125
    %v281 = vunpack.c.l.b16 %v126
    %v282 = vunpack.c.l.b16 %v127
    %v283 = vunpack.c.l.b16 %v128
    %v284 = vunpack.c.l.b16 %v129
    %v285 = vunpack.c.l.b16 %v130
    %v286 = vunpack.c.l.b16 %v131
    %v287 = vunpack.c.l.b16 %v132
    %v288 = vunpack.c.l.b16 %v133
    %v289 = vpack.c.b16 %v274, %v273
    %v290 = vpack.c.b16 %v276, %v275
    %v291 = vpack.c.b16 %v278, %v277
    %v292 = vpack.c.b16 %v280, %v279
    %v293 = vpack.c.b16 %v282, %v281
    %v294 = vpack.c.b16 %v284, %v283
    %v295 = vpack.c.b16 %v286, %v285
    %v296 = vpack.c.b16 %v288, %v287
    %305 = vmatprep.subr.bf16.mxu0 0
    %306 = vmatpush1.bf16.msra.mxu0 %v296
    %307 = vmatprep.subr.bf16.mxu0 0
    %308 = vmatpush1.bf16.msra.mxu0 %v295
    %309 = vmatprep.subr.bf16.mxu0 0
    %310 = vmatpush1.bf16.msra.mxu0 %v294
    %311 = vmatprep.subr.bf16.mxu0 0
    %312 = vmatpush1.bf16.msra.mxu0 %v293
    %313 = vmatprep.subr.bf16.mxu0 0
    %314 = vmatpush1.bf16.msra.mxu0 %v292
    %315 = vmatprep.subr.bf16.mxu0 0
    %316 = vmatpush1.bf16.msra.mxu0 %v291
    %317 = vmatprep.subr.bf16.mxu0 0
    %318 = vmatpush1.bf16.msra.mxu0 %v290
    %319 = vmatprep.subr.bf16.mxu0 0
    %320 = vmatpush1.bf16.msra.mxu0 %v289
    %321 = vmatprep.subr.bf16.mxu0 0
    %322 = vmatpush2.bf16.msra.mxu0 0
    %323 = vmatprep.subr.bf16.mxu0 0
    %324 = vmatpush2.bf16.msra.mxu0 0
    %325 = vmatprep.subr.bf16.mxu0 0
    %326 = vmatpush2.bf16.msra.mxu0 0
    %327 = vmatprep.subr.bf16.mxu0 0
    %328 = vmatpush2.bf16.msra.mxu0 0
    %329 = vmatprep.subr.bf16.mxu0 0
    %330 = vmatpush2.bf16.msra.mxu0 0
    %331 = vmatprep.subr.bf16.mxu0 0
    %332 = vmatpush2.bf16.msra.mxu0 0
    %333 = vmatprep.subr.bf16.mxu0 0
    %334 = vmatpush2.bf16.msra.mxu0 0
    %335 = vmatprep.subr.bf16.mxu0 0
    %336 = vmatpush2.bf16.msra.mxu0 0
    %337 = vmatprep.mubr.bf16.mxu0 0
    %338 = vmatmul.mubr.bf16.gmra.mxu0 %v233
    %v339 = vpop.f32.mrf.mxu0
    %v340 = vadd.f32 %v183, %v339
    %v341 = vpop.f32.mrf.mxu0
    %v342 = vpop.f32.mrf.mxu0
    %v343 = vadd.f32 %v183, %v342
    %v344 = vpop.f32.mrf.mxu0
    %345 = vmatprep.mubr.bf16.mxu0 0
    %346 = vmatmul.mubr.bf16.gmra.mxu0 %v234
    %v347 = vpop.f32.mrf.mxu0
    %v348 = vadd.f32 %v183, %v347
    %v349 = vpop.f32.mrf.mxu0
    %v350 = vpop.f32.mrf.mxu0
    %v351 = vadd.f32 %v183, %v350
    %v352 = vpop.f32.mrf.mxu0
    %353 = vmatprep.mubr.bf16.mxu0 0
    %354 = vmatmul.mubr.bf16.gmra.mxu0 %v235
    %v355 = vpop.f32.mrf.mxu0
    %v356 = vadd.f32 %v183, %v355
    %v357 = vpop.f32.mrf.mxu0
    %v358 = vpop.f32.mrf.mxu0
    %v359 = vadd.f32 %v183, %v358
    %v360 = vpop.f32.mrf.mxu0
    %361 = vmatprep.mubr.bf16.mxu0 0
    %362 = vmatmul.mubr.bf16.gmra.mxu0 %v236
    %v363 = vpop.f32.mrf.mxu0
    %v364 = vadd.f32 %v183, %v363
    %v365 = vpop.f32.mrf.mxu0
    %v366 = vpop.f32.mrf.mxu0
    %v367 = vadd.f32 %v183, %v366
    %v368 = vpop.f32.mrf.mxu0
    %369 = vmatprep.mubr.bf16.mxu0 0
    %370 = vmatmul.mubr.bf16.gmra.mxu0 %v237
    %v371 = vpop.f32.mrf.mxu0
    %v372 = vadd.f32 %v183, %v371
    %v373 = vpop.f32.mrf.mxu0
    %v374 = vpop.f32.mrf.mxu0
    %v375 = vadd.f32 %v183, %v374
    %v376 = vpop.f32.mrf.mxu0
    %377 = vmatprep.mubr.bf16.mxu0 0
    %378 = vmatmul.mubr.bf16.gmra.mxu0 %v238
    %v379 = vpop.f32.mrf.mxu0
    %v380 = vadd.f32 %v183, %v379
    %v381 = vpop.f32.mrf.mxu0
    %v382 = vpop.f32.mrf.mxu0
    %v383 = vadd.f32 %v183, %v382
    %v384 = vpop.f32.mrf.mxu0
    %385 = vmatprep.mubr.bf16.mxu0 0
    %386 = vmatmul.mubr.bf16.gmra.mxu0 %v239
    %v387 = vpop.f32.mrf.mxu0
    %v388 = vadd.f32 %v183, %v387
    %v389 = vpop.f32.mrf.mxu0
    %v390 = vpop.f32.mrf.mxu0
    %v391 = vadd.f32 %v183, %v390
    %v392 = vpop.f32.mrf.mxu0
    %393 = vmatprep.mubr.bf16.mxu0 0
    %394 = vmatmul.mubr.bf16.gmra.mxu0 %v240
    %v395 = vpop.f32.mrf.mxu0
    %v396 = vadd.f32 %v183, %v395
    %v397 = vpop.f32.mrf.mxu0
    %v398 = vpop.f32.mrf.mxu0
    %v399 = vadd.f32 %v183, %v398
    %v400 = vpop.f32.mrf.mxu0
    %401 = vmatprep.mubr.bf16.mxu0 0
    %402 = vmatmul.mubr.bf16.gmra.mxu0 %v241
    %v403 = vpop.f32.mrf.mxu0
    %v404 = vadd.f32 %v183, %v403
    %v405 = vpop.f32.mrf.mxu0
    %v406 = vpop.f32.mrf.mxu0
    %v407 = vadd.f32 %v183, %v406
    %v408 = vpop.f32.mrf.mxu0
    %409 = vmatprep.mubr.bf16.mxu0 0
    %410 = vmatmul.mubr.bf16.gmra.mxu0 %v242
    %v411 = vpop.f32.mrf.mxu0
    %v412 = vadd.f32 %v183, %v411
    %v413 = vpop.f32.mrf.mxu0
    %v414 = vpop.f32.mrf.mxu0
    %v415 = vadd.f32 %v183, %v414
    %v416 = vpop.f32.mrf.mxu0
    %417 = vmatprep.mubr.bf16.mxu0 0
    %418 = vmatmul.mubr.bf16.gmra.mxu0 %v243
    %v419 = vpop.f32.mrf.mxu0
    %v420 = vadd.f32 %v183, %v419
    %v421 = vpop.f32.mrf.mxu0
    %v422 = vpop.f32.mrf.mxu0
    %v423 = vadd.f32 %v183, %v422
    %v424 = vpop.f32.mrf.mxu0
    %425 = vmatprep.mubr.bf16.mxu0 0
    %426 = vmatmul.mubr.bf16.gmra.mxu0 %v244
    %v427 = vpop.f32.mrf.mxu0
    %v428 = vadd.f32 %v183, %v427
    %v429 = vpop.f32.mrf.mxu0
    %v430 = vpop.f32.mrf.mxu0
    %v431 = vadd.f32 %v183, %v430
    %v432 = vpop.f32.mrf.mxu0
    %433 = vdwg.mxu0
    %v434 = vtanh.pop %v340
    %v435 = vtanh.pop %v343
    %v436 = vtanh.pop %v348
    %v437 = vtanh.pop %v351
    %v438 = vtanh.pop %v356
    %v439 = vtanh.pop %v359
    %v440 = vtanh.pop %v364
    %v441 = vtanh.pop %v367
    %v442 = vtanh.pop %v372
    %v443 = vtanh.pop %v375
    %v444 = vtanh.pop %v380
    %v445 = vtanh.pop %v383
    %v446 = vtanh.pop %v388
    %v447 = vtanh.pop %v391
    %v448 = vtanh.pop %v396
    %v449 = vtanh.pop %v399
    %v450 = vtanh.pop %v404
    %v451 = vtanh.pop %v407
    %v452 = vtanh.pop %v412
    %v453 = vtanh.pop %v415
    %v454 = vtanh.pop %v420
    %v455 = vtanh.pop %v423
    %v456 = vtanh.pop %v428
    %v457 = vtanh.pop %v431
    %v458 = vpack.c.bf16 %v435, %v434
    %v459 = vpack.c.bf16 %v437, %v436
    %v460 = vpack.c.bf16 %v439, %v438
    %v461 = vpack.c.bf16 %v441, %v440
    %v462 = vpack.c.bf16 %v443, %v442
    %v463 = vpack.c.bf16 %v445, %v444
    %v464 = vpack.c.bf16 %v447, %v446
    %v465 = vpack.c.bf16 %v449, %v448
    %v466 = vpack.c.bf16 %v451, %v450
    %v467 = vpack.c.bf16 %v453, %v452
    %v468 = vpack.c.bf16 %v455, %v454
    %v469 = vpack.c.bf16 %v457, %v456
    %v486 = vunpack.c.l.b16 %v135
    %v487 = vunpack.c.l.b16 %v136
    %v488 = vunpack.c.l.b16 %v137
    %v489 = vunpack.c.l.b16 %v138
    %v490 = vunpack.c.l.b16 %v139
    %v491 = vunpack.c.l.b16 %v140
    %v492 = vunpack.c.l.b16 %v141
    %v493 = vunpack.c.l.b16 %v142
    %v494 = vunpack.c.l.b16 %v143
    %v495 = vunpack.c.l.b16 %v144
    %v496 = vunpack.c.l.b16 %v145
    %v497 = vunpack.c.l.b16 %v146
    %v498 = vunpack.c.l.b16 %v147
    %v499 = vunpack.c.l.b16 %v148
    %v500 = vunpack.c.l.b16 %v149
    %v501 = vunpack.c.l.b16 %v150
    %v502 = vpack.c.b16 %v487, %v486
    %v503 = vpack.c.b16 %v489, %v488
    %v504 = vpack.c.b16 %v491, %v490
    %v505 = vpack.c.b16 %v493, %v492
    %v506 = vpack.c.b16 %v495, %v494
    %v507 = vpack.c.b16 %v497, %v496
    %v508 = vpack.c.b16 %v499, %v498
    %v509 = vpack.c.b16 %v501, %v500
    %518 = vmatprep.subr.bf16.mxu0 0
    %519 = vmatpush1.bf16.msra.mxu0 %v509
    %520 = vmatprep.subr.bf16.mxu0 0
    %521 = vmatpush1.bf16.msra.mxu0 %v508
    %522 = vmatprep.subr.bf16.mxu0 0
    %523 = vmatpush1.bf16.msra.mxu0 %v507
    %524 = vmatprep.subr.bf16.mxu0 0
    %525 = vmatpush1.bf16.msra.mxu0 %v506
    %526 = vmatprep.subr.bf16.mxu0 0
    %527 = vmatpush1.bf16.msra.mxu0 %v505
    %528 = vmatprep.subr.bf16.mxu0 0
    %529 = vmatpush1.bf16.msra.mxu0 %v504
    %530 = vmatprep.subr.bf16.mxu0 0
    %531 = vmatpush1.bf16.msra.mxu0 %v503
    %532 = vmatprep.subr.bf16.mxu0 0
    %533 = vmatpush1.bf16.msra.mxu0 %v502
    %534 = vmatprep.subr.bf16.mxu0 0
    %535 = vmatpush2.bf16.msra.mxu0 0
    %536 = vmatprep.subr.bf16.mxu0 0
    %537 = vmatpush2.bf16.msra.mxu0 0
    %538 = vmatprep.subr.bf16.mxu0 0
    %539 = vmatpush2.bf16.msra.mxu0 0
    %540 = vmatprep.subr.bf16.mxu0 0
    %541 = vmatpush2.bf16.msra.mxu0 0
    %542 = vmatprep.subr.bf16.mxu0 0
    %543 = vmatpush2.bf16.msra.mxu0 0
    %544 = vmatprep.subr.bf16.mxu0 0
    %545 = vmatpush2.bf16.msra.mxu0 0
    %546 = vmatprep.subr.bf16.mxu0 0
    %547 = vmatpush2.bf16.msra.mxu0 0
    %548 = vmatprep.subr.bf16.mxu0 0
    %549 = vmatpush2.bf16.msra.mxu0 0
    %550 = vmatprep.mubr.bf16.mxu0 0
    %551 = vmatmul.mubr.bf16.gmra.mxu0 %v458
    %v552 = vpop.f32.mrf.mxu0
    %v553 = vadd.f32 0.0, %v552
    %v554 = vpop.f32.mrf.mxu0
    %v555 = vpop.f32.mrf.mxu0
    %v556 = vadd.f32 0.0, %v555
    %v557 = vpop.f32.mrf.mxu0
    %558 = vmatprep.mubr.bf16.mxu0 0
    %559 = vmatmul.mubr.bf16.gmra.mxu0 %v459
    %v560 = vpop.f32.mrf.mxu0
    %v561 = vadd.f32 0.0, %v560
    %v562 = vpop.f32.mrf.mxu0
    %v563 = vpop.f32.mrf.mxu0
    %v564 = vadd.f32 0.0, %v563
    %v565 = vpop.f32.mrf.mxu0
    %566 = vmatprep.mubr.bf16.mxu0 0
    %567 = vmatmul.mubr.bf16.gmra.mxu0 %v460
    %v568 = vpop.f32.mrf.mxu0
    %v569 = vadd.f32 0.0, %v568
    %v570 = vpop.f32.mrf.mxu0
    %v571 = vpop.f32.mrf.mxu0
    %v572 = vadd.f32 0.0, %v571
    %v573 = vpop.f32.mrf.mxu0
    %574 = vmatprep.mubr.bf16.mxu0 0
    %575 = vmatmul.mubr.bf16.gmra.mxu0 %v461
    %v576 = vpop.f32.mrf.mxu0
    %v577 = vadd.f32 0.0, %v576
    %v578 = vpop.f32.mrf.mxu0
    %v579 = vpop.f32.mrf.mxu0
    %v580 = vadd.f32 0.0, %v579
    %v581 = vpop.f32.mrf.mxu0
    %582 = vmatprep.mubr.bf16.mxu0 0
    %583 = vmatmul.mubr.bf16.gmra.mxu0 %v462
    %v584 = vpop.f32.mrf.mxu0
    %v585 = vadd.f32 0.0, %v584
    %v586 = vpop.f32.mrf.mxu0
    %v587 = vpop.f32.mrf.mxu0
    %v588 = vadd.f32 0.0, %v587
    %v589 = vpop.f32.mrf.mxu0
    %590 = vmatprep.mubr.bf16.mxu0 0
    %591 = vmatmul.mubr.bf16.gmra.mxu0 %v463
    %v592 = vpop.f32.mrf.mxu0
    %v593 = vadd.f32 0.0, %v592
    %v594 = vpop.f32.mrf.mxu0
    %v595 = vpop.f32.mrf.mxu0
    %v596 = vadd.f32 0.0, %v595
    %v597 = vpop.f32.mrf.mxu0
    %598 = vmatprep.mubr.bf16.mxu0 0
    %599 = vmatmul.mubr.bf16.gmra.mxu0 %v464
    %v600 = vpop.f32.mrf.mxu0
    %v601 = vadd.f32 0.0, %v600
    %v602 = vpop.f32.mrf.mxu0
    %v603 = vpop.f32.mrf.mxu0
    %v604 = vadd.f32 0.0, %v603
    %v605 = vpop.f32.mrf.mxu0
    %606 = vmatprep.mubr.bf16.mxu0 0
    %607 = vmatmul.mubr.bf16.gmra.mxu0 %v465
    %v608 = vpop.f32.mrf.mxu0
    %v609 = vadd.f32 0.0, %v608
    %v610 = vpop.f32.mrf.mxu0
    %v611 = vpop.f32.mrf.mxu0
    %v612 = vadd.f32 0.0, %v611
    %v613 = vpop.f32.mrf.mxu0
    %614 = vmatprep.mubr.bf16.mxu0 0
    %615 = vmatmul.mubr.bf16.gmra.mxu0 %v466
    %v616 = vpop.f32.mrf.mxu0
    %v617 = vadd.f32 0.0, %v616
    %v618 = vpop.f32.mrf.mxu0
    %v619 = vpop.f32.mrf.mxu0
    %v620 = vadd.f32 0.0, %v619
    %v621 = vpop.f32.mrf.mxu0
    %622 = vmatprep.mubr.bf16.mxu0 0
    %623 = vmatmul.mubr.bf16.gmra.mxu0 %v467
    %v624 = vpop.f32.mrf.mxu0
    %v625 = vadd.f32 0.0, %v624
    %v626 = vpop.f32.mrf.mxu0
    %v627 = vpop.f32.mrf.mxu0
    %v628 = vadd.f32 0.0, %v627
    %v629 = vpop.f32.mrf.mxu0
    %630 = vmatprep.mubr.bf16.mxu0 0
    %631 = vmatmul.mubr.bf16.gmra.mxu0 %v468
    %v632 = vpop.f32.mrf.mxu0
    %v633 = vadd.f32 0.0, %v632
    %v634 = vpop.f32.mrf.mxu0
    %v635 = vpop.f32.mrf.mxu0
    %v636 = vadd.f32 0.0, %v635
    %v637 = vpop.f32.mrf.mxu0
    %638 = vmatprep.mubr.bf16.mxu0 0
    %639 = vmatmul.mubr.bf16.gmra.mxu0 %v469
    %v640 = vpop.f32.mrf.mxu0
    %v641 = vadd.f32 0.0, %v640
    %v642 = vpop.f32.mrf.mxu0
    %v643 = vpop.f32.mrf.mxu0
    %v644 = vadd.f32 0.0, %v643
    %v645 = vpop.f32.mrf.mxu0
    %646 = vdwg.mxu0
    %v647 = vlaneseq
    %v648 = vand.u32 %v647, 127
    %v649 = vld [vmem:[%s62] sm:$0xff]
    %v650 = vld [vmem:[%s62 + $0x8] sm:$0xff]
    %v651 = vld [vmem:[%s62 + $0x10] sm:$0xff]
    %v652 = vld [vmem:[%s62 + $0x18] sm:$0xff]
    %v653 = vld [vmem:[%s62 + $0x20] sm:$0xff]
    %v654 = vld [vmem:[%s62 + $0x28] sm:$0xff]
    %v655 = vld [vmem:[%s62 + $0x30] sm:$0xff]
    %v656 = vld [vmem:[%s62 + $0x38] sm:$0xff]
    %v657 = vld [vmem:[%s62 + $0x40] sm:$0xff]
    %v658 = vld [vmem:[%s62 + $0x48] sm:$0xff]
    %v659 = vld [vmem:[%s62 + $0x50] sm:$0xff]
    %v660 = vld [vmem:[%s62 + $0x58] sm:$0xff]
    %v661 = vld [vmem:[%s62 + $0x60] sm:$0xff]
    %v662 = vld [vmem:[%s62 + $0x68] sm:$0xff]
    %v663 = vld [vmem:[%s62 + $0x70] sm:$0xff]
    %v664 = vld [vmem:[%s62 + $0x78] sm:$0xff]
    %v665 = vld [vmem:[%s62 + $0x80] sm:$0xff]
    %v666 = vld [vmem:[%s62 + $0x88] sm:$0xff]
    %v667 = vld [vmem:[%s62 + $0x90] sm:$0xff]
    %v668 = vld [vmem:[%s62 + $0x98] sm:$0xff]
    %v669 = vld [vmem:[%s62 + $0xa0] sm:$0xff]
    %v670 = vld [vmem:[%s62 + $0xa8] sm:$0xff]
    %v671 = vld [vmem:[%s62 + $0xb0] sm:$0xff]
    %v672 = vld [vmem:[%s62 + $0xb8] sm:$0xff]
    %673 = vset.pattern.permute.xlu0 0
    %674 = vperm.xlu0 %673, %v649
    %v675 = vpop.permute.xlu0 %674
    %676 = vset.pattern.permute.xlu0 0
    %677 = vperm.xlu0 %676, %v650
    %v678 = vpop.permute.xlu0 %677
    %679 = vset.pattern.permute.xlu0 0
    %680 = vperm.xlu0 %679, %v651
    %v681 = vpop.permute.xlu0 %680
    %682 = vset.pattern.permute.xlu0 0
    %683 = vperm.xlu0 %682, %v652
    %v684 = vpop.permute.xlu0 %683
    %685 = vset.pattern.permute.xlu0 0
    %686 = vperm.xlu0 %685, %v653
    %v687 = vpop.permute.xlu0 %686
    %688 = vset.pattern.permute.xlu0 0
    %689 = vperm.xlu0 %688, %v654
    %v690 = vpop.permute.xlu0 %689
    %691 = vset.pattern.permute.xlu0 0
    %692 = vperm.xlu0 %691, %v655
    %v693 = vpop.permute.xlu0 %692
    %694 = vset.pattern.permute.xlu0 0
    %695 = vperm.xlu0 %694, %v656
    %v696 = vpop.permute.xlu0 %695
    %697 = vset.pattern.permute.xlu0 0
    %698 = vperm.xlu0 %697, %v657
    %v699 = vpop.permute.xlu0 %698
    %700 = vset.pattern.permute.xlu0 0
    %701 = vperm.xlu0 %700, %v658
    %v702 = vpop.permute.xlu0 %701
    %703 = vset.pattern.permute.xlu0 0
    %704 = vperm.xlu0 %703, %v659
    %v705 = vpop.permute.xlu0 %704
    %706 = vset.pattern.permute.xlu0 0
    %707 = vperm.xlu0 %706, %v660
    %v708 = vpop.permute.xlu0 %707
    %709 = vset.pattern.permute.xlu0 0
    %710 = vperm.xlu0 %709, %v661
    %v711 = vpop.permute.xlu0 %710
    %712 = vset.pattern.permute.xlu0 0
    %713 = vperm.xlu0 %712, %v662
    %v714 = vpop.permute.xlu0 %713
    %715 = vset.pattern.permute.xlu0 0
    %716 = vperm.xlu0 %715, %v663
    %v717 = vpop.permute.xlu0 %716
    %718 = vset.pattern.permute.xlu0 0
    %719 = vperm.xlu0 %718, %v664
    %v720 = vpop.permute.xlu0 %719
    %721 = vset.pattern.permute.xlu0 0
    %722 = vperm.xlu0 %721, %v665
    %v723 = vpop.permute.xlu0 %722
    %724 = vset.pattern.permute.xlu0 0
    %725 = vperm.xlu0 %724, %v666
    %v726 = vpop.permute.xlu0 %725
    %727 = vset.pattern.permute.xlu0 0
    %728 = vperm.xlu0 %727, %v667
    %v729 = vpop.permute.xlu0 %728
    %730 = vset.pattern.permute.xlu0 0
    %731 = vperm.xlu0 %730, %v668
    %v732 = vpop.permute.xlu0 %731
    %733 = vset.pattern.permute.xlu0 0
    %734 = vperm.xlu0 %733, %v669
    %v735 = vpop.permute.xlu0 %734
    %736 = vset.pattern.permute.xlu0 0
    %737 = vperm.xlu0 %736, %v670
    %v738 = vpop.permute.xlu0 %737
    %739 = vset.pattern.permute.xlu0 0
    %740 = vperm.xlu0 %739, %v671
    %v741 = vpop.permute.xlu0 %740
    %742 = vset.pattern.permute.xlu0 0
    %743 = vperm.xlu0 %742, %v672
    %v744 = vpop.permute.xlu0 %743
    %vm745 = vcmp.eq.s32.totalorder %v648, %v675
    %vm746 = vcmp.eq.s32.totalorder %v648, %v678
    %vm747 = vcmp.eq.s32.totalorder %v648, %v681
    %vm748 = vcmp.eq.s32.totalorder %v648, %v684
    %vm749 = vcmp.eq.s32.totalorder %v648, %v687
    %vm750 = vcmp.eq.s32.totalorder %v648, %v690
    %vm751 = vcmp.eq.s32.totalorder %v648, %v693
    %vm752 = vcmp.eq.s32.totalorder %v648, %v696
    %vm753 = vcmp.eq.s32.totalorder %v648, %v699
    %vm754 = vcmp.eq.s32.totalorder %v648, %v702
    %vm755 = vcmp.eq.s32.totalorder %v648, %v705
    %vm756 = vcmp.eq.s32.totalorder %v648, %v708
    %vm757 = vcmp.eq.s32.totalorder %v648, %v711
    %vm758 = vcmp.eq.s32.totalorder %v648, %v714
    %vm759 = vcmp.eq.s32.totalorder %v648, %v717
    %vm760 = vcmp.eq.s32.totalorder %v648, %v720
    %vm761 = vcmp.eq.s32.totalorder %v648, %v723
    %vm762 = vcmp.eq.s32.totalorder %v648, %v726
    %vm763 = vcmp.eq.s32.totalorder %v648, %v729
    %vm764 = vcmp.eq.s32.totalorder %v648, %v732
    %vm765 = vcmp.eq.s32.totalorder %v648, %v735
    %vm766 = vcmp.eq.s32.totalorder %v648, %v738
    %vm767 = vcmp.eq.s32.totalorder %v648, %v741
    %vm768 = vcmp.eq.s32.totalorder %v648, %v744
    %v769 = vsub.f32 %v553, 1.0
    %v770 = vsub.f32 %v556, 1.0
    %v771 = vsub.f32 %v561, 1.0
    %v772 = vsub.f32 %v564, 1.0
    %v773 = vsub.f32 %v569, 1.0
    %v774 = vsub.f32 %v572, 1.0
    %v775 = vsub.f32 %v577, 1.0
    %v776 = vsub.f32 %v580, 1.0
    %v777 = vsub.f32 %v585, 1.0
    %v778 = vsub.f32 %v588, 1.0
    %v779 = vsub.f32 %v593, 1.0
    %v780 = vsub.f32 %v596, 1.0
    %v781 = vsub.f32 %v601, 1.0
    %v782 = vsub.f32 %v604, 1.0
    %v783 = vsub.f32 %v609, 1.0
    %v784 = vsub.f32 %v612, 1.0
    %v785 = vsub.f32 %v617, 1.0
    %v786 = vsub.f32 %v620, 1.0
    %v787 = vsub.f32 %v625, 1.0
    %v788 = vsub.f32 %v628, 1.0
    %v789 = vsub.f32 %v633, 1.0
    %v790 = vsub.f32 %v636, 1.0
    %v791 = vsub.f32 %v641, 1.0
    %v792 = vsub.f32 %v644, 1.0
    %v793 = vsel %vm745, %v769, %v553
    %v794 = vsel %vm746, %v770, %v556
    %v795 = vsel %vm747, %v771, %v561
    %v796 = vsel %vm748, %v772, %v564
    %v797 = vsel %vm749, %v773, %v569
    %v798 = vsel %vm750, %v774, %v572
    %v799 = vsel %vm751, %v775, %v577
    %v800 = vsel %vm752, %v776, %v580
    %v801 = vsel %vm753, %v777, %v585
    %v802 = vsel %vm754, %v778, %v588
    %v803 = vsel %vm755, %v779, %v593
    %v804 = vsel %vm756, %v780, %v596
    %v805 = vsel %vm757, %v781, %v601
    %v806 = vsel %vm758, %v782, %v604
    %v807 = vsel %vm759, %v783, %v609
    %v808 = vsel %vm760, %v784, %v612
    %v809 = vsel %vm761, %v785, %v617
    %v810 = vsel %vm762, %v786, %v620
    %v811 = vsel %vm763, %v787, %v625
    %v812 = vsel %vm764, %v788, %v628
    %v813 = vsel %vm765, %v789, %v633
    %v814 = vsel %vm766, %v790, %v636
    %v815 = vsel %vm767, %v791, %v641
    %v816 = vsel %vm768, %v792, %v644
    %v817 = vmul.f32 %v793, %v793
    %v818 = vmul.f32 %v794, %v794
    %v819 = vmul.f32 %v795, %v795
    %v820 = vmul.f32 %v796, %v796
    %v821 = vmul.f32 %v797, %v797
    %v822 = vmul.f32 %v798, %v798
    %v823 = vmul.f32 %v799, %v799
    %v824 = vmul.f32 %v800, %v800
    %v825 = vmul.f32 %v801, %v801
    %v826 = vmul.f32 %v802, %v802
    %v827 = vmul.f32 %v803, %v803
    %v828 = vmul.f32 %v804, %v804
    %v829 = vmul.f32 %v805, %v805
    %v830 = vmul.f32 %v806, %v806
    %v831 = vmul.f32 %v807, %v807
    %v832 = vmul.f32 %v808, %v808
    %v833 = vmul.f32 %v809, %v809
    %v834 = vmul.f32 %v810, %v810
    %v835 = vmul.f32 %v811, %v811
    %v836 = vmul.f32 %v812, %v812
    %v837 = vmul.f32 %v813, %v813
    %v838 = vmul.f32 %v814, %v814
    %v839 = vmul.f32 %v815, %v815
    %v840 = vmul.f32 %v816, %v816
    %p841 = scmp.le.s32.totalorder %s153, 300
    // Predicated region
    $region26: #{tpu_custom_call.1} parent=1 // pred_check
      %p842 = pneg %p841
    $region27: #{tpu_custom_call.1} parent=1 // pred_check_branch
      %844 = sbr.rel (%p842) target = $region29
    $region28: #{tpu_custom_call.1} parent=1 // pred_region
      %v845 = vld [vmem:[#allocation2] sm:$0xff]
      %v846 = vld [vmem:[#allocation2 + $0x8] sm:$0xff]
      %v847 = vld [vmem:[#allocation2 + $0x10] sm:$0xff]
      %v848 = vld [vmem:[#allocation2 + $0x18] sm:$0xff]
      %v849 = vld [vmem:[#allocation2 + $0x20] sm:$0xff]
      %v850 = vld [vmem:[#allocation2 + $0x28] sm:$0xff]
      %v851 = vld [vmem:[#allocation2 + $0x30] sm:$0xff]
      %v852 = vld [vmem:[#allocation2 + $0x38] sm:$0xff]
      %v853 = vld [vmem:[#allocation2 + $0x40] sm:$0xff]
      %v854 = vld [vmem:[#allocation2 + $0x48] sm:$0xff]
      %v855 = vld [vmem:[#allocation2 + $0x50] sm:$0xff]
      %v856 = vld [vmem:[#allocation2 + $0x58] sm:$0xff]
      %v857 = vld [vmem:[#allocation2 + $0x60] sm:$0xff]
      %v858 = vld [vmem:[#allocation2 + $0x68] sm:$0xff]
      %v859 = vld [vmem:[#allocation2 + $0x70] sm:$0xff]
      %v860 = vld [vmem:[#allocation2 + $0x78] sm:$0xff]
      %v861 = vld [vmem:[#allocation2 + $0x80] sm:$0xff]
      %v862 = vld [vmem:[#allocation2 + $0x88] sm:$0xff]
      %v863 = vld [vmem:[#allocation2 + $0x90] sm:$0xff]
      %v864 = vld [vmem:[#allocation2 + $0x98] sm:$0xff]
      %v865 = vld [vmem:[#allocation2 + $0xa0] sm:$0xff]
      %v866 = vld [vmem:[#allocation2 + $0xa8] sm:$0xff]
      %v867 = vld [vmem:[#allocation2 + $0xb0] sm:$0xff]
      %v868 = vld [vmem:[#allocation2 + $0xb8] sm:$0xff]
      %v869 = vadd.f32 %v845, %v817
      %v870 = vadd.f32 %v846, %v818
      %v871 = vadd.f32 %v847, %v819
      %v872 = vadd.f32 %v848, %v820
      %v873 = vadd.f32 %v849, %v821
      %v874 = vadd.f32 %v850, %v822
      %v875 = vadd.f32 %v851, %v823
      %v876 = vadd.f32 %v852, %v824
      %v877 = vadd.f32 %v853, %v825
      %v878 = vadd.f32 %v854, %v826
      %v879 = vadd.f32 %v855, %v827
      %v880 = vadd.f32 %v856, %v828
      %v881 = vadd.f32 %v857, %v829
      %v882 = vadd.f32 %v858, %v830
      %v883 = vadd.f32 %v859, %v831
      %v884 = vadd.f32 %v860, %v832
      %v885 = vadd.f32 %v861, %v833
      %v886 = vadd.f32 %v862, %v834
      %v887 = vadd.f32 %v863, %v835
      %v888 = vadd.f32 %v864, %v836
      %v889 = vadd.f32 %v865, %v837
      %v890 = vadd.f32 %v866, %v838
      %v891 = vadd.f32 %v867, %v839
      %v892 = vadd.f32 %v868, %v840
      %893 = vst [vmem:[#allocation2] sm:$0xff] %v869
      %894 = vst [vmem:[#allocation2 + $0x8] sm:$0xff] %v870
      %895 = vst [vmem:[#allocation2 + $0x10] sm:$0xff] %v871
      %896 = vst [vmem:[#allocation2 + $0x18] sm:$0xff] %v872
      %897 = vst [vmem:[#allocation2 + $0x20] sm:$0xff] %v873
      %898 = vst [vmem:[#allocation2 + $0x28] sm:$0xff] %v874
      %899 = vst [vmem:[#allocation2 + $0x30] sm:$0xff] %v875
      %900 = vst [vmem:[#allocation2 + $0x38] sm:$0xff] %v876
      %901 = vst [vmem:[#allocation2 + $0x40] sm:$0xff] %v877
      %902 = vst [vmem:[#allocation2 + $0x48] sm:$0xff] %v878
      %903 = vst [vmem:[#allocation2 + $0x50] sm:$0xff] %v879
      %904 = vst [vmem:[#allocation2 + $0x58] sm:$0xff] %v880
      %905 = vst [vmem:[#allocation2 + $0x60] sm:$0xff] %v881
      %906 = vst [vmem:[#allocation2 + $0x68] sm:$0xff] %v882
      %907 = vst [vmem:[#allocation2 + $0x70] sm:$0xff] %v883
      %908 = vst [vmem:[#allocation2 + $0x78] sm:$0xff] %v884
      %909 = vst [vmem:[#allocation2 + $0x80] sm:$0xff] %v885
      %910 = vst [vmem:[#allocation2 + $0x88] sm:$0xff] %v886
      %911 = vst [vmem:[#allocation2 + $0x90] sm:$0xff] %v887
      %912 = vst [vmem:[#allocation2 + $0x98] sm:$0xff] %v888
      %913 = vst [vmem:[#allocation2 + $0xa0] sm:$0xff] %v889
      %914 = vst [vmem:[#allocation2 + $0xa8] sm:$0xff] %v890
      %915 = vst [vmem:[#allocation2 + $0xb0] sm:$0xff] %v891
      %916 = vst [vmem:[#allocation2 + $0xb8] sm:$0xff] %v892
    $region29: #{tpu_custom_call.1} parent=1 // pred_fallthru
      _
    // Predicated region
    $region30: #{tpu_custom_call.1} parent=1 // pred_check
      %p917 = pneg %p154
    $region31: #{tpu_custom_call.1} parent=1 // pred_check_branch
      %919 = sbr.rel (%p917) target = $region33
    $region32: #{tpu_custom_call.1} parent=1 // pred_region
      %v920 = vlaneseq
      %v921 = vshrl.u32 %v920, 7
      %v922 = vadd.s32 %v921, 8
      %v923 = vadd.s32 %v921, 16
      %v924 = vadd.s32 %v921, 24
      %v925 = vadd.s32 %v921, 32
      %v926 = vadd.s32 %v921, 40
      %v927 = vadd.s32 %v921, 48
      %v928 = vadd.s32 %v921, 56
      %v929 = vadd.s32 %v921, 64
      %v930 = vadd.s32 %v921, 72
      %v931 = vadd.s32 %v921, 80
      %v932 = vadd.s32 %v921, 88
      %v933 = vadd.s32 %v921, 96
      %v934 = vadd.s32 %v921, 104
      %v935 = vadd.s32 %v921, 112
      %v936 = vadd.s32 %v921, 120
      %v937 = vadd.s32 %v921, 128
      %v938 = vadd.s32 %v921, 136
      %v939 = vadd.s32 %v921, 144
      %v940 = vadd.s32 %v921, 152
      %v941 = vadd.s32 %v921, 160
      %v942 = vadd.s32 %v921, 168
      %v943 = vadd.s32 %v921, 176
      %v944 = vadd.s32 %v921, 184
      %v945 = vstv %s152
      %v946 = vadd.s32 %v945, %v921
      %v947 = vadd.s32 %v945, %v922
      %v948 = vadd.s32 %v945, %v923
      %v949 = vadd.s32 %v945, %v924
      %v950 = vadd.s32 %v945, %v925
      %v951 = vadd.s32 %v945, %v926
      %v952 = vadd.s32 %v945, %v927
      %v953 = vadd.s32 %v945, %v928
      %v954 = vadd.s32 %v945, %v929
      %v955 = vadd.s32 %v945, %v930
      %v956 = vadd.s32 %v945, %v931
      %v957 = vadd.s32 %v945, %v932
      %v958 = vadd.s32 %v945, %v933
      %v959 = vadd.s32 %v945, %v934
      %v960 = vadd.s32 %v945, %v935
      %v961 = vadd.s32 %v945, %v936
      %v962 = vadd.s32 %v945, %v937
      %v963 = vadd.s32 %v945, %v938
      %v964 = vadd.s32 %v945, %v939
      %v965 = vadd.s32 %v945, %v940
      %v966 = vadd.s32 %v945, %v941
      %v967 = vadd.s32 %v945, %v942
      %v968 = vadd.s32 %v945, %v943
      %v969 = vadd.s32 %v945, %v944
      %v970 = vld [vmem:[#allocation2] sm:$0xff]
      %v971 = vld [vmem:[#allocation2 + $0x8] sm:$0xff]
      %v972 = vld [vmem:[#allocation2 + $0x10] sm:$0xff]
      %v973 = vld [vmem:[#allocation2 + $0x18] sm:$0xff]
      %v974 = vld [vmem:[#allocation2 + $0x20] sm:$0xff]
      %v975 = vld [vmem:[#allocation2 + $0x28] sm:$0xff]
      %v976 = vld [vmem:[#allocation2 + $0x30] sm:$0xff]
      %v977 = vld [vmem:[#allocation2 + $0x38] sm:$0xff]
      %v978 = vld [vmem:[#allocation2 + $0x40] sm:$0xff]
      %v979 = vld [vmem:[#allocation2 + $0x48] sm:$0xff]
      %v980 = vld [vmem:[#allocation2 + $0x50] sm:$0xff]
      %v981 = vld [vmem:[#allocation2 + $0x58] sm:$0xff]
      %v982 = vld [vmem:[#allocation2 + $0x60] sm:$0xff]
      %v983 = vld [vmem:[#allocation2 + $0x68] sm:$0xff]
      %v984 = vld [vmem:[#allocation2 + $0x70] sm:$0xff]
      %v985 = vld [vmem:[#allocation2 + $0x78] sm:$0xff]
      %v986 = vld [vmem:[#allocation2 + $0x80] sm:$0xff]
      %v987 = vld [vmem:[#allocation2 + $0x88] sm:$0xff]
      %v988 = vld [vmem:[#allocation2 + $0x90] sm:$0xff]
      %v989 = vld [vmem:[#allocation2 + $0x98] sm:$0xff]
      %v990 = vld [vmem:[#allocation2 + $0xa0] sm:$0xff]
      %v991 = vld [vmem:[#allocation2 + $0xa8] sm:$0xff]
      %v992 = vld [vmem:[#allocation2 + $0xb0] sm:$0xff]
      %v993 = vld [vmem:[#allocation2 + $0xb8] sm:$0xff]
      %vm994 = vcmp.lt.s32.totalorder %v946, 300
      %vm995 = vcmp.lt.s32.totalorder %v947, 300
      %vm996 = vcmp.lt.s32.totalorder %v948, 300
      %vm997 = vcmp.lt.s32.totalorder %v949, 300
      %vm998 = vcmp.lt.s32.totalorder %v950, 300
      %vm999 = vcmp.lt.s32.totalorder %v951, 300
      %vm1000 = vcmp.lt.s32.totalorder %v952, 300
      %vm1001 = vcmp.lt.s32.totalorder %v953, 300
      %vm1002 = vcmp.lt.s32.totalorder %v954, 300
      %vm1003 = vcmp.lt.s32.totalorder %v955, 300
      %vm1004 = vcmp.lt.s32.totalorder %v956, 300
      %vm1005 = vcmp.lt.s32.totalorder %v957, 300
      %vm1006 = vcmp.lt.s32.totalorder %v958, 300
      %vm1007 = vcmp.lt.s32.totalorder %v959, 300
      %vm1008 = vcmp.lt.s32.totalorder %v960, 300
      %vm1009 = vcmp.lt.s32.totalorder %v961, 300
      %vm1010 = vcmp.lt.s32.totalorder %v962, 300
      %vm1011 = vcmp.lt.s32.totalorder %v963, 300
      %vm1012 = vcmp.lt.s32.totalorder %v964, 300
      %vm1013 = vcmp.lt.s32.totalorder %v965, 300
      %vm1014 = vcmp.lt.s32.totalorder %v966, 300
      %vm1015 = vcmp.lt.s32.totalorder %v967, 300
      %vm1016 = vcmp.lt.s32.totalorder %v968, 300
      %vm1017 = vcmp.lt.s32.totalorder %v969, 300
      %v1018 = vsel %vm994, %v817, 0.0
      %v1019 = vsel %vm995, %v818, 0.0
      %v1020 = vsel %vm996, %v819, 0.0
      %v1021 = vsel %vm997, %v820, 0.0
      %v1022 = vsel %vm998, %v821, 0.0
      %v1023 = vsel %vm999, %v822, 0.0
      %v1024 = vsel %vm1000, %v823, 0.0
      %v1025 = vsel %vm1001, %v824, 0.0
      %v1026 = vsel %vm1002, %v825, 0.0
      %v1027 = vsel %vm1003, %v826, 0.0
      %v1028 = vsel %vm1004, %v827, 0.0
      %v1029 = vsel %vm1005, %v828, 0.0
      %v1030 = vsel %vm1006, %v829, 0.0
      %v1031 = vsel %vm1007, %v830, 0.0
      %v1032 = vsel %vm1008, %v831, 0.0
      %v1033 = vsel %vm1009, %v832, 0.0
      %v1034 = vsel %vm1010, %v833, 0.0
      %v1035 = vsel %vm1011, %v834, 0.0
      %v1036 = vsel %vm1012, %v835, 0.0
      %v1037 = vsel %vm1013, %v836, 0.0
      %v1038 = vsel %vm1014, %v837, 0.0
      %v1039 = vsel %vm1015, %v838, 0.0
      %v1040 = vsel %vm1016, %v839, 0.0
      %v1041 = vsel %vm1017, %v840, 0.0
      %v1042 = vadd.f32 %v970, %v1018
      %v1043 = vadd.f32 %v971, %v1019
      %v1044 = vadd.f32 %v972, %v1020
      %v1045 = vadd.f32 %v973, %v1021
      %v1046 = vadd.f32 %v974, %v1022
      %v1047 = vadd.f32 %v975, %v1023
      %v1048 = vadd.f32 %v976, %v1024
      %v1049 = vadd.f32 %v977, %v1025
      %v1050 = vadd.f32 %v978, %v1026
      %v1051 = vadd.f32 %v979, %v1027
      %v1052 = vadd.f32 %v980, %v1028
      %v1053 = vadd.f32 %v981, %v1029
      %v1054 = vadd.f32 %v982, %v1030
      %v1055 = vadd.f32 %v983, %v1031
      %v1056 = vadd.f32 %v984, %v1032
      %v1057 = vadd.f32 %v985, %v1033
      %v1058 = vadd.f32 %v986, %v1034
      %v1059 = vadd.f32 %v987, %v1035
      %v1060 = vadd.f32 %v988, %v1036
      %v1061 = vadd.f32 %v989, %v1037
      %v1062 = vadd.f32 %v990, %v1038
      %v1063 = vadd.f32 %v991, %v1039
      %v1064 = vadd.f32 %v992, %v1040
      %v1065 = vadd.f32 %v993, %v1041
      %1066 = vst [vmem:[#allocation2] sm:$0xff] %v1042
      %1067 = vst [vmem:[#allocation2 + $0x8] sm:$0xff] %v1043
      %1068 = vst [vmem:[#allocation2 + $0x10] sm:$0xff] %v1044
      %1069 = vst [vmem:[#allocation2 + $0x18] sm:$0xff] %v1045
      %1070 = vst [vmem:[#allocation2 + $0x20] sm:$0xff] %v1046
      %1071 = vst [vmem:[#allocation2 + $0x28] sm:$0xff] %v1047
      %1072 = vst [vmem:[#allocation2 + $0x30] sm:$0xff] %v1048
      %1073 = vst [vmem:[#allocation2 + $0x38] sm:$0xff] %v1049
      %1074 = vst [vmem:[#allocation2 + $0x40] sm:$0xff] %v1050
      %1075 = vst [vmem:[#allocation2 + $0x48] sm:$0xff] %v1051
      %1076 = vst [vmem:[#allocation2 + $0x50] sm:$0xff] %v1052
      %1077 = vst [vmem:[#allocation2 + $0x58] sm:$0xff] %v1053
      %1078 = vst [vmem:[#allocation2 + $0x60] sm:$0xff] %v1054
      %1079 = vst [vmem:[#allocation2 + $0x68] sm:$0xff] %v1055
      %1080 = vst [vmem:[#allocation2 + $0x70] sm:$0xff] %v1056
      %1081 = vst [vmem:[#allocation2 + $0x78] sm:$0xff] %v1057
      %1082 = vst [vmem:[#allocation2 + $0x80] sm:$0xff] %v1058
      %1083 = vst [vmem:[#allocation2 + $0x88] sm:$0xff] %v1059
      %1084 = vst [vmem:[#allocation2 + $0x90] sm:$0xff] %v1060
      %1085 = vst [vmem:[#allocation2 + $0x98] sm:$0xff] %v1061
      %1086 = vst [vmem:[#allocation2 + $0xa0] sm:$0xff] %v1062
      %1087 = vst [vmem:[#allocation2 + $0xa8] sm:$0xff] %v1063
      %1088 = vst [vmem:[#allocation2 + $0xb0] sm:$0xff] %v1064
      %1089 = vst [vmem:[#allocation2 + $0xb8] sm:$0xff] %v1065
    $region33: #{tpu_custom_call.1} parent=1 // pred_fallthru
      _
    %v1090 = vld [vmem:[%s54 + $0x60] sm:$0xf]
    %v1091 = vld [vmem:[%s54 + $0x64] sm:$0xf]
    %v1092 = vld [vmem:[%s54 + $0x68] sm:$0xf]
    %v1093 = vld [vmem:[%s54 + $0x6c] sm:$0xf]
    %v1094 = vld [vmem:[%s54 + $0x70] sm:$0xf]
    %v1095 = vld [vmem:[%s54 + $0x74] sm:$0xf]
    %v1096 = vld [vmem:[%s54 + $0x78] sm:$0xf]
    %v1097 = vld [vmem:[%s54 + $0x7c] sm:$0xf]
    %v1098 = vld [vmem:[%s54 + $0x80] sm:$0xf]
    %v1099 = vld [vmem:[%s54 + $0x84] sm:$0xf]
    %v1100 = vld [vmem:[%s54 + $0x88] sm:$0xf]
    %v1101 = vld [vmem:[%s54 + $0x8c] sm:$0xf]
    %v1102 = vld [vmem:[%s54 + $0x90] sm:$0xf]
    %v1103 = vld [vmem:[%s54 + $0x94] sm:$0xf]
    %v1104 = vld [vmem:[%s54 + $0x98] sm:$0xf]
    %v1105 = vld [vmem:[%s54 + $0x9c] sm:$0xf]
    %v1106 = vld [vmem:[%s54 + $0xa0] sm:$0xf]
    %v1107 = vld [vmem:[%s54 + $0xa4] sm:$0xf]
    %v1108 = vld [vmem:[%s54 + $0xa8] sm:$0xf]
    %v1109 = vld [vmem:[%s54 + $0xac] sm:$0xf]
    %v1110 = vld [vmem:[%s54 + $0xb0] sm:$0xf]
    %v1111 = vld [vmem:[%s54 + $0xb4] sm:$0xf]
    %v1112 = vld [vmem:[%s54 + $0xb8] sm:$0xf]
    %v1113 = vld [vmem:[%s54 + $0xbc] sm:$0xf]
    %v1138 = vunpack.c.l.b16 %v1090
    %v1139 = vunpack.c.l.b16 %v1091
    %v1140 = vunpack.c.l.b16 %v1092
    %v1141 = vunpack.c.l.b16 %v1093
    %v1142 = vunpack.c.l.b16 %v1094
    %v1143 = vunpack.c.l.b16 %v1095
    %v1144 = vunpack.c.l.b16 %v1096
    %v1145 = vunpack.c.l.b16 %v1097
    %v1146 = vunpack.c.l.b16 %v1098
    %v1147 = vunpack.c.l.b16 %v1099
    %v1148 = vunpack.c.l.b16 %v1100
    %v1149 = vunpack.c.l.b16 %v1101
    %v1150 = vunpack.c.l.b16 %v1102
    %v1151 = vunpack.c.l.b16 %v1103
    %v1152 = vunpack.c.l.b16 %v1104
    %v1153 = vunpack.c.l.b16 %v1105
    %v1154 = vunpack.c.l.b16 %v1106
    %v1155 = vunpack.c.l.b16 %v1107
    %v1156 = vunpack.c.l.b16 %v1108
    %v1157 = vunpack.c.l.b16 %v1109
    %v1158 = vunpack.c.l.b16 %v1110
    %v1159 = vunpack.c.l.b16 %v1111
    %v1160 = vunpack.c.l.b16 %v1112
    %v1161 = vunpack.c.l.b16 %v1113
    %v1162 = vpack.c.b16 %v1139, %v1138
    %v1163 = vpack.c.b16 %v1141, %v1140
    %v1164 = vpack.c.b16 %v1143, %v1142
    %v1165 = vpack.c.b16 %v1145, %v1144
    %v1166 = vpack.c.b16 %v1147, %v1146
    %v1167 = vpack.c.b16 %v1149, %v1148
    %v1168 = vpack.c.b16 %v1151, %v1150
    %v1169 = vpack.c.b16 %v1153, %v1152
    %v1170 = vpack.c.b16 %v1155, %v1154
    %v1171 = vpack.c.b16 %v1157, %v1156
    %v1172 = vpack.c.b16 %v1159, %v1158
    %v1173 = vpack.c.b16 %v1161, %v1160
    %1186 = vmatprep.subr.bf16.mxu0 0
    %1187 = vmatpush1.bf16.msra.mxu0 %v296
    %1188 = vmatprep.subr.bf16.mxu0 0
    %1189 = vmatpush1.bf16.msra.mxu0 %v295
    %1190 = vmatprep.subr.bf16.mxu0 0
    %1191 = vmatpush1.bf16.msra.mxu0 %v294
    %1192 = vmatprep.subr.bf16.mxu0 0
    %1193 = vmatpush1.bf16.msra.mxu0 %v293
    %1194 = vmatprep.subr.bf16.mxu0 0
    %1195 = vmatpush1.bf16.msra.mxu0 %v292
    %1196 = vmatprep.subr.bf16.mxu0 0
    %1197 = vmatpush1.bf16.msra.mxu0 %v291
    %1198 = vmatprep.subr.bf16.mxu0 0
    %1199 = vmatpush1.bf16.msra.mxu0 %v290
    %1200 = vmatprep.subr.bf16.mxu0 0
    %1201 = vmatpush1.bf16.msra.mxu0 %v289
    %1202 = vmatprep.subr.bf16.mxu0 0
    %1203 = vmatpush2.bf16.msra.mxu0 0
    %1204 = vmatprep.subr.bf16.mxu0 0
    %1205 = vmatpush2.bf16.msra.mxu0 0
    %1206 = vmatprep.subr.bf16.mxu0 0
    %1207 = vmatpush2.bf16.msra.mxu0 0
    %1208 = vmatprep.subr.bf16.mxu0 0
    %1209 = vmatpush2.bf16.msra.mxu0 0
    %1210 = vmatprep.subr.bf16.mxu0 0
    %1211 = vmatpush2.bf16.msra.mxu0 0
    %1212 = vmatprep.subr.bf16.mxu0 0
    %1213 = vmatpush2.bf16.msra.mxu0 0
    %1214 = vmatprep.subr.bf16.mxu0 0
    %1215 = vmatpush2.bf16.msra.mxu0 0
    %1216 = vmatprep.subr.bf16.mxu0 0
    %1217 = vmatpush2.bf16.msra.mxu0 0
    %1218 = vmatprep.mubr.bf16.mxu0 0
    %1219 = vmatmul.mubr.bf16.gmra.mxu0 %v1162
    %v1220 = vpop.f32.mrf.mxu0
    %v1221 = vadd.f32 %v183, %v1220
    %v1222 = vpop.f32.mrf.mxu0
    %v1223 = vpop.f32.mrf.mxu0
    %v1224 = vadd.f32 %v183, %v1223
    %v1225 = vpop.f32.mrf.mxu0
    %1226 = vmatprep.mubr.bf16.mxu0 0
    %1227 = vmatmul.mubr.bf16.gmra.mxu0 %v1163
    %v1228 = vpop.f32.mrf.mxu0
    %v1229 = vadd.f32 %v183, %v1228
    %v1230 = vpop.f32.mrf.mxu0
    %v1231 = vpop.f32.mrf.mxu0
    %v1232 = vadd.f32 %v183, %v1231
    %v1233 = vpop.f32.mrf.mxu0
    %1234 = vmatprep.mubr.bf16.mxu0 0
    %1235 = vmatmul.mubr.bf16.gmra.mxu0 %v1164
    %v1236 = vpop.f32.mrf.mxu0
    %v1237 = vadd.f32 %v183, %v1236
    %v1238 = vpop.f32.mrf.mxu0
    %v1239 = vpop.f32.mrf.mxu0
    %v1240 = vadd.f32 %v183, %v1239
    %v1241 = vpop.f32.mrf.mxu0
    %1242 = vmatprep.mubr.bf16.mxu0 0
    %1243 = vmatmul.mubr.bf16.gmra.mxu0 %v1165
    %v1244 = vpop.f32.mrf.mxu0
    %v1245 = vadd.f32 %v183, %v1244
    %v1246 = vpop.f32.mrf.mxu0
    %v1247 = vpop.f32.mrf.mxu0
    %v1248 = vadd.f32 %v183, %v1247
    %v1249 = vpop.f32.mrf.mxu0
    %1250 = vmatprep.mubr.bf16.mxu0 0
    %1251 = vmatmul.mubr.bf16.gmra.mxu0 %v1166
    %v1252 = vpop.f32.mrf.mxu0
    %v1253 = vadd.f32 %v183, %v1252
    %v1254 = vpop.f32.mrf.mxu0
    %v1255 = vpop.f32.mrf.mxu0
    %v1256 = vadd.f32 %v183, %v1255
    %v1257 = vpop.f32.mrf.mxu0
    %1258 = vmatprep.mubr.bf16.mxu0 0
    %1259 = vmatmul.mubr.bf16.gmra.mxu0 %v1167
    %v1260 = vpop.f32.mrf.mxu0
    %v1261 = vadd.f32 %v183, %v1260
    %v1262 = vpop.f32.mrf.mxu0
    %v1263 = vpop.f32.mrf.mxu0
    %v1264 = vadd.f32 %v183, %v1263
    %v1265 = vpop.f32.mrf.mxu0
    %1266 = vmatprep.mubr.bf16.mxu0 0
    %1267 = vmatmul.mubr.bf16.gmra.mxu0 %v1168
    %v1268 = vpop.f32.mrf.mxu0
    %v1269 = vadd.f32 %v183, %v1268
    %v1270 = vpop.f32.mrf.mxu0
    %v1271 = vpop.f32.mrf.mxu0
    %v1272 = vadd.f32 %v183, %v1271
    %v1273 = vpop.f32.mrf.mxu0
    %1274 = vmatprep.mubr.bf16.mxu0 0
    %1275 = vmatmul.mubr.bf16.gmra.mxu0 %v1169
    %v1276 = vpop.f32.mrf.mxu0
    %v1277 = vadd.f32 %v183, %v1276
    %v1278 = vpop.f32.mrf.mxu0
    %v1279 = vpop.f32.mrf.mxu0
    %v1280 = vadd.f32 %v183, %v1279
    %v1281 = vpop.f32.mrf.mxu0
    %1282 = vmatprep.mubr.bf16.mxu0 0
    %1283 = vmatmul.mubr.bf16.gmra.mxu0 %v1170
    %v1284 = vpop.f32.mrf.mxu0
    %v1285 = vadd.f32 %v183, %v1284
    %v1286 = vpop.f32.mrf.mxu0
    %v1287 = vpop.f32.mrf.mxu0
    %v1288 = vadd.f32 %v183, %v1287
    %v1289 = vpop.f32.mrf.mxu0
    %1290 = vmatprep.mubr.bf16.mxu0 0
    %1291 = vmatmul.mubr.bf16.gmra.mxu0 %v1171
    %v1292 = vpop.f32.mrf.mxu0
    %v1293 = vadd.f32 %v183, %v1292
    %v1294 = vpop.f32.mrf.mxu0
    %v1295 = vpop.f32.mrf.mxu0
    %v1296 = vadd.f32 %v183, %v1295
    %v1297 = vpop.f32.mrf.mxu0
    %1298 = vmatprep.mubr.bf16.mxu0 0
    %1299 = vmatmul.mubr.bf16.gmra.mxu0 %v1172
    %v1300 = vpop.f32.mrf.mxu0
    %v1301 = vadd.f32 %v183, %v1300
    %v1302 = vpop.f32.mrf.mxu0
    %v1303 = vpop.f32.mrf.mxu0
    %v1304 = vadd.f32 %v183, %v1303
    %v1305 = vpop.f32.mrf.mxu0
    %1306 = vmatprep.mubr.bf16.mxu0 0
    %1307 = vmatmul.mubr.bf16.gmra.mxu0 %v1173
    %v1308 = vpop.f32.mrf.mxu0
    %v1309 = vadd.f32 %v183, %v1308
    %v1310 = vpop.f32.mrf.mxu0
    %v1311 = vpop.f32.mrf.mxu0
    %v1312 = vadd.f32 %v183, %v1311
    %v1313 = vpop.f32.mrf.mxu0
    %1314 = vdwg.mxu0
    %v1315 = vtanh.pop %v1221
    %v1316 = vtanh.pop %v1224
    %v1317 = vtanh.pop %v1229
    %v1318 = vtanh.pop %v1232
    %v1319 = vtanh.pop %v1237
    %v1320 = vtanh.pop %v1240
    %v1321 = vtanh.pop %v1245
    %v1322 = vtanh.pop %v1248
    %v1323 = vtanh.pop %v1253
    %v1324 = vtanh.pop %v1256
    %v1325 = vtanh.pop %v1261
    %v1326 = vtanh.pop %v1264
    %v1327 = vtanh.pop %v1269
    %v1328 = vtanh.pop %v1272
    %v1329 = vtanh.pop %v1277
    %v1330 = vtanh.pop %v1280
    %v1331 = vtanh.pop %v1285
    %v1332 = vtanh.pop %v1288
    %v1333 = vtanh.pop %v1293
    %v1334 = vtanh.pop %v1296
    %v1335 = vtanh.pop %v1301
    %v1336 = vtanh.pop %v1304
    %v1337 = vtanh.pop %v1309
    %v1338 = vtanh.pop %v1312
    %v1339 = vpack.c.bf16 %v1316, %v1315
    %v1340 = vpack.c.bf16 %v1318, %v1317
    %v1341 = vpack.c.bf16 %v1320, %v1319
    %v1342 = vpack.c.bf16 %v1322, %v1321
    %v1343 = vpack.c.bf16 %v1324, %v1323
    %v1344 = vpack.c.bf16 %v1326, %v1325
    %v1345 = vpack.c.bf16 %v1328, %v1327
    %v1346 = vpack.c.bf16 %v1330, %v1329
    %v1347 = vpack.c.bf16 %v1332, %v1331
    %v1348 = vpack.c.bf16 %v1334, %v1333
    %v1349 = vpack.c.bf16 %v1336, %v1335
    %v1350 = vpack.c.bf16 %v1338, %v1337
    %1351 = vmatprep.subr.bf16.mxu0 0
    %1352 = vmatpush1.bf16.msra.mxu0 %v509
    %1353 = vmatprep.subr.bf16.mxu0 0
    %1354 = vmatpush1.bf16.msra.mxu0 %v508
    %1355 = vmatprep.subr.bf16.mxu0 0
    %1356 = vmatpush1.bf16.msra.mxu0 %v507
    %1357 = vmatprep.subr.bf16.mxu0 0
    %1358 = vmatpush1.bf16.msra.mxu0 %v506
    %1359 = vmatprep.subr.bf16.mxu0 0
    %1360 = vmatpush1.bf16.msra.mxu0 %v505
    %1361 = vmatprep.subr.bf16.mxu0 0
    %1362 = vmatpush1.bf16.msra.mxu0 %v504
    %1363 = vmatprep.subr.bf16.mxu0 0
    %1364 = vmatpush1.bf16.msra.mxu0 %v503
    %1365 = vmatprep.subr.bf16.mxu0 0
    %1366 = vmatpush1.bf16.msra.mxu0 %v502
    %1367 = vmatprep.subr.bf16.mxu0 0
    %1368 = vmatpush2.bf16.msra.mxu0 0
    %1369 = vmatprep.subr.bf16.mxu0 0
    %1370 = vmatpush2.bf16.msra.mxu0 0
    %1371 = vmatprep.subr.bf16.mxu0 0
    %1372 = vmatpush2.bf16.msra.mxu0 0
    %1373 = vmatprep.subr.bf16.mxu0 0
    %1374 = vmatpush2.bf16.msra.mxu0 0
    %1375 = vmatprep.subr.bf16.mxu0 0
    %1376 = vmatpush2.bf16.msra.mxu0 0
    %1377 = vmatprep.subr.bf16.mxu0 0
    %1378 = vmatpush2.bf16.msra.mxu0 0
    %1379 = vmatprep.subr.bf16.mxu0 0
    %1380 = vmatpush2.bf16.msra.mxu0 0
    %1381 = vmatprep.subr.bf16.mxu0 0
    %1382 = vmatpush2.bf16.msra.mxu0 0
    %1383 = vmatprep.mubr.bf16.mxu0 0
    %1384 = vmatmul.mubr.bf16.gmra.mxu0 %v1339
    %v1385 = vpop.f32.mrf.mxu0
    %v1386 = vadd.f32 0.0, %v1385
    %v1387 = vpop.f32.mrf.mxu0
    %v1388 = vpop.f32.mrf.mxu0
    %v1389 = vadd.f32 0.0, %v1388
    %v1390 = vpop.f32.mrf.mxu0
    %1391 = vmatprep.mubr.bf16.mxu0 0
    %1392 = vmatmul.mubr.bf16.gmra.mxu0 %v1340
    %v1393 = vpop.f32.mrf.mxu0
    %v1394 = vadd.f32 0.0, %v1393
    %v1395 = vpop.f32.mrf.mxu0
    %v1396 = vpop.f32.mrf.mxu0
    %v1397 = vadd.f32 0.0, %v1396
    %v1398 = vpop.f32.mrf.mxu0
    %1399 = vmatprep.mubr.bf16.mxu0 0
    %1400 = vmatmul.mubr.bf16.gmra.mxu0 %v1341
    %v1401 = vpop.f32.mrf.mxu0
    %v1402 = vadd.f32 0.0, %v1401
    %v1403 = vpop.f32.mrf.mxu0
    %v1404 = vpop.f32.mrf.mxu0
    %v1405 = vadd.f32 0.0, %v1404
    %v1406 = vpop.f32.mrf.mxu0
    %1407 = vmatprep.mubr.bf16.mxu0 0
    %1408 = vmatmul.mubr.bf16.gmra.mxu0 %v1342
    %v1409 = vpop.f32.mrf.mxu0
    %v1410 = vadd.f32 0.0, %v1409
    %v1411 = vpop.f32.mrf.mxu0
    %v1412 = vpop.f32.mrf.mxu0
    %v1413 = vadd.f32 0.0, %v1412
    %v1414 = vpop.f32.mrf.mxu0
    %1415 = vmatprep.mubr.bf16.mxu0 0
    %1416 = vmatmul.mubr.bf16.gmra.mxu0 %v1343
    %v1417 = vpop.f32.mrf.mxu0
    %v1418 = vadd.f32 0.0, %v1417
    %v1419 = vpop.f32.mrf.mxu0
    %v1420 = vpop.f32.mrf.mxu0
    %v1421 = vadd.f32 0.0, %v1420
    %v1422 = vpop.f32.mrf.mxu0
    %1423 = vmatprep.mubr.bf16.mxu0 0
    %1424 = vmatmul.mubr.bf16.gmra.mxu0 %v1344
    %v1425 = vpop.f32.mrf.mxu0
    %v1426 = vadd.f32 0.0, %v1425
    %v1427 = vpop.f32.mrf.mxu0
    %v1428 = vpop.f32.mrf.mxu0
    %v1429 = vadd.f32 0.0, %v1428
    %v1430 = vpop.f32.mrf.mxu0
    %1431 = vmatprep.mubr.bf16.mxu0 0
    %1432 = vmatmul.mubr.bf16.gmra.mxu0 %v1345
    %v1433 = vpop.f32.mrf.mxu0
    %v1434 = vadd.f32 0.0, %v1433
    %v1435 = vpop.f32.mrf.mxu0
    %v1436 = vpop.f32.mrf.mxu0
    %v1437 = vadd.f32 0.0, %v1436
    %v1438 = vpop.f32.mrf.mxu0
    %1439 = vmatprep.mubr.bf16.mxu0 0
    %1440 = vmatmul.mubr.bf16.gmra.mxu0 %v1346
    %v1441 = vpop.f32.mrf.mxu0
    %v1442 = vadd.f32 0.0, %v1441
    %v1443 = vpop.f32.mrf.mxu0
    %v1444 = vpop.f32.mrf.mxu0
    %v1445 = vadd.f32 0.0, %v1444
    %v1446 = vpop.f32.mrf.mxu0
    %1447 = vmatprep.mubr.bf16.mxu0 0
    %1448 = vmatmul.mubr.bf16.gmra.mxu0 %v1347
    %v1449 = vpop.f32.mrf.mxu0
    %v1450 = vadd.f32 0.0, %v1449
    %v1451 = vpop.f32.mrf.mxu0
    %v1452 = vpop.f32.mrf.mxu0
    %v1453 = vadd.f32 0.0, %v1452
    %v1454 = vpop.f32.mrf.mxu0
    %1455 = vmatprep.mubr.bf16.mxu0 0
    %1456 = vmatmul.mubr.bf16.gmra.mxu0 %v1348
    %v1457 = vpop.f32.mrf.mxu0
    %v1458 = vadd.f32 0.0, %v1457
    %v1459 = vpop.f32.mrf.mxu0
    %v1460 = vpop.f32.mrf.mxu0
    %v1461 = vadd.f32 0.0, %v1460
    %v1462 = vpop.f32.mrf.mxu0
    %1463 = vmatprep.mubr.bf16.mxu0 0
    %1464 = vmatmul.mubr.bf16.gmra.mxu0 %v1349
    %v1465 = vpop.f32.mrf.mxu0
    %v1466 = vadd.f32 0.0, %v1465
    %v1467 = vpop.f32.mrf.mxu0
    %v1468 = vpop.f32.mrf.mxu0
    %v1469 = vadd.f32 0.0, %v1468
    %v1470 = vpop.f32.mrf.mxu0
    %1471 = vmatprep.mubr.bf16.mxu0 0
    %1472 = vmatmul.mubr.bf16.gmra.mxu0 %v1350
    %v1473 = vpop.f32.mrf.mxu0
    %v1474 = vadd.f32 0.0, %v1473
    %v1475 = vpop.f32.mrf.mxu0
    %v1476 = vpop.f32.mrf.mxu0
    %v1477 = vadd.f32 0.0, %v1476
    %v1478 = vpop.f32.mrf.mxu0
    %1479 = vdwg.mxu0
    %v1480 = vld [vmem:[%s62 + $0xc0] sm:$0xff]
    %v1481 = vld [vmem:[%s62 + $0xc8] sm:$0xff]
    %v1482 = vld [vmem:[%s62 + $0xd0] sm:$0xff]
    %v1483 = vld [vmem:[%s62 + $0xd8] sm:$0xff]
    %v1484 = vld [vmem:[%s62 + $0xe0] sm:$0xff]
    %v1485 = vld [vmem:[%s62 + $0xe8] sm:$0xff]
    %v1486 = vld [vmem:[%s62 + $0xf0] sm:$0xff]
    %v1487 = vld [vmem:[%s62 + $0xf8] sm:$0xff]
    %v1488 = vld [vmem:[%s62 + $0x100] sm:$0xff]
    %v1489 = vld [vmem:[%s62 + $0x108] sm:$0xff]
    %v1490 = vld [vmem:[%s62 + $0x110] sm:$0xff]
    %v1491 = vld [vmem:[%s62 + $0x118] sm:$0xff]
    %v1492 = vld [vmem:[%s62 + $0x120] sm:$0xff]
    %v1493 = vld [vmem:[%s62 + $0x128] sm:$0xff]
    %v1494 = vld [vmem:[%s62 + $0x130] sm:$0xff]
    %v1495 = vld [vmem:[%s62 + $0x138] sm:$0xff]
    %v1496 = vld [vmem:[%s62 + $0x140] sm:$0xff]
    %v1497 = vld [vmem:[%s62 + $0x148] sm:$0xff]
    %v1498 = vld [vmem:[%s62 + $0x150] sm:$0xff]
    %v1499 = vld [vmem:[%s62 + $0x158] sm:$0xff]
    %v1500 = vld [vmem:[%s62 + $0x160] sm:$0xff]
    %v1501 = vld [vmem:[%s62 + $0x168] sm:$0xff]
    %v1502 = vld [vmem:[%s62 + $0x170] sm:$0xff]
    %v1503 = vld [vmem:[%s62 + $0x178] sm:$0xff]
    %1504 = vset.pattern.permute.xlu0 0
    %1505 = vperm.xlu0 %1504, %v1480
    %v1506 = vpop.permute.xlu0 %1505
    %1507 = vset.pattern.permute.xlu0 0
    %1508 = vperm.xlu0 %1507, %v1481
    %v1509 = vpop.permute.xlu0 %1508
    %1510 = vset.pattern.permute.xlu0 0
    %1511 = vperm.xlu0 %1510, %v1482
    %v1512 = vpop.permute.xlu0 %1511
    %1513 = vset.pattern.permute.xlu0 0
    %1514 = vperm.xlu0 %1513, %v1483
    %v1515 = vpop.permute.xlu0 %1514
    %1516 = vset.pattern.permute.xlu0 0
    %1517 = vperm.xlu0 %1516, %v1484
    %v1518 = vpop.permute.xlu0 %1517
    %1519 = vset.pattern.permute.xlu0 0
    %1520 = vperm.xlu0 %1519, %v1485
    %v1521 = vpop.permute.xlu0 %1520
    %1522 = vset.pattern.permute.xlu0 0
    %1523 = vperm.xlu0 %1522, %v1486
    %v1524 = vpop.permute.xlu0 %1523
    %1525 = vset.pattern.permute.xlu0 0
    %1526 = vperm.xlu0 %1525, %v1487
    %v1527 = vpop.permute.xlu0 %1526
    %1528 = vset.pattern.permute.xlu0 0
    %1529 = vperm.xlu0 %1528, %v1488
    %v1530 = vpop.permute.xlu0 %1529
    %1531 = vset.pattern.permute.xlu0 0
    %1532 = vperm.xlu0 %1531, %v1489
    %v1533 = vpop.permute.xlu0 %1532
    %1534 = vset.pattern.permute.xlu0 0
    %1535 = vperm.xlu0 %1534, %v1490
    %v1536 = vpop.permute.xlu0 %1535
    %1537 = vset.pattern.permute.xlu0 0
    %1538 = vperm.xlu0 %1537, %v1491
    %v1539 = vpop.permute.xlu0 %1538
    %1540 = vset.pattern.permute.xlu0 0
    %1541 = vperm.xlu0 %1540, %v1492
    %v1542 = vpop.permute.xlu0 %1541
    %1543 = vset.pattern.permute.xlu0 0
    %1544 = vperm.xlu0 %1543, %v1493
    %v1545 = vpop.permute.xlu0 %1544
    %1546 = vset.pattern.permute.xlu0 0
    %1547 = vperm.xlu0 %1546, %v1494
    %v1548 = vpop.permute.xlu0 %1547
    %1549 = vset.pattern.permute.xlu0 0
    %1550 = vperm.xlu0 %1549, %v1495
    %v1551 = vpop.permute.xlu0 %1550
    %1552 = vset.pattern.permute.xlu0 0
    %1553 = vperm.xlu0 %1552, %v1496
    %v1554 = vpop.permute.xlu0 %1553
    %1555 = vset.pattern.permute.xlu0 0
    %1556 = vperm.xlu0 %1555, %v1497
    %v1557 = vpop.permute.xlu0 %1556
    %1558 = vset.pattern.permute.xlu0 0
    %1559 = vperm.xlu0 %1558, %v1498
    %v1560 = vpop.permute.xlu0 %1559
    %1561 = vset.pattern.permute.xlu0 0
    %1562 = vperm.xlu0 %1561, %v1499
    %v1563 = vpop.permute.xlu0 %1562
    %1564 = vset.pattern.permute.xlu0 0
    %1565 = vperm.xlu0 %1564, %v1500
    %v1566 = vpop.permute.xlu0 %1565
    %1567 = vset.pattern.permute.xlu0 0
    %1568 = vperm.xlu0 %1567, %v1501
    %v1569 = vpop.permute.xlu0 %1568
    %1570 = vset.pattern.permute.xlu0 0
    %1571 = vperm.xlu0 %1570, %v1502
    %v1572 = vpop.permute.xlu0 %1571
    %1573 = vset.pattern.permute.xlu0 0
    %1574 = vperm.xlu0 %1573, %v1503
    %v1575 = vpop.permute.xlu0 %1574
    %vm1576 = vcmp.eq.s32.totalorder %v648, %v1506
    %vm1577 = vcmp.eq.s32.totalorder %v648, %v1509
    %vm1578 = vcmp.eq.s32.totalorder %v648, %v1512
    %vm1579 = vcmp.eq.s32.totalorder %v648, %v1515
    %vm1580 = vcmp.eq.s32.totalorder %v648, %v1518
    %vm1581 = vcmp.eq.s32.totalorder %v648, %v1521
    %vm1582 = vcmp.eq.s32.totalorder %v648, %v1524
    %vm1583 = vcmp.eq.s32.totalorder %v648, %v1527
    %vm1584 = vcmp.eq.s32.totalorder %v648, %v1530
    %vm1585 = vcmp.eq.s32.totalorder %v648, %v1533
    %vm1586 = vcmp.eq.s32.totalorder %v648, %v1536
    %vm1587 = vcmp.eq.s32.totalorder %v648, %v1539
    %vm1588 = vcmp.eq.s32.totalorder %v648, %v1542
    %vm1589 = vcmp.eq.s32.totalorder %v648, %v1545
    %vm1590 = vcmp.eq.s32.totalorder %v648, %v1548
    %vm1591 = vcmp.eq.s32.totalorder %v648, %v1551
    %vm1592 = vcmp.eq.s32.totalorder %v648, %v1554
    %vm1593 = vcmp.eq.s32.totalorder %v648, %v1557
    %vm1594 = vcmp.eq.s32.totalorder %v648, %v1560
    %vm1595 = vcmp.eq.s32.totalorder %v648, %v1563
    %vm1596 = vcmp.eq.s32.totalorder %v648, %v1566
    %vm1597 = vcmp.eq.s32.totalorder %v648, %v1569
    %vm1598 = vcmp.eq.s32.totalorder %v648, %v1572
    %vm1599 = vcmp.eq.s32.totalorder %v648, %v1575
    %v1600 = vsub.f32 %v1386, 1.0
    %v1601 = vsub.f32 %v1389, 1.0
    %v1602 = vsub.f32 %v1394, 1.0
    %v1603 = vsub.f32 %v1397, 1.0
    %v1604 = vsub.f32 %v1402, 1.0
    %v1605 = vsub.f32 %v1405, 1.0
    %v1606 = vsub.f32 %v1410, 1.0
    %v1607 = vsub.f32 %v1413, 1.0
    %v1608 = vsub.f32 %v1418, 1.0
    %v1609 = vsub.f32 %v1421, 1.0
    %v1610 = vsub.f32 %v1426, 1.0
    %v1611 = vsub.f32 %v1429, 1.0
    %v1612 = vsub.f32 %v1434, 1.0
    %v1613 = vsub.f32 %v1437, 1.0
    %v1614 = vsub.f32 %v1442, 1.0
    %v1615 = vsub.f32 %v1445, 1.0
    %v1616 = vsub.f32 %v1450, 1.0
    %v1617 = vsub.f32 %v1453, 1.0
    %v1618 = vsub.f32 %v1458, 1.0
    %v1619 = vsub.f32 %v1461, 1.0
    %v1620 = vsub.f32 %v1466, 1.0
    %v1621 = vsub.f32 %v1469, 1.0
    %v1622 = vsub.f32 %v1474, 1.0
    %v1623 = vsub.f32 %v1477, 1.0
    %v1624 = vsel %vm1576, %v1600, %v1386
    %v1625 = vsel %vm1577, %v1601, %v1389
    %v1626 = vsel %vm1578, %v1602, %v1394
    %v1627 = vsel %vm1579, %v1603, %v1397
    %v1628 = vsel %vm1580, %v1604, %v1402
    %v1629 = vsel %vm1581, %v1605, %v1405
    %v1630 = vsel %vm1582, %v1606, %v1410
    %v1631 = vsel %vm1583, %v1607, %v1413
    %v1632 = vsel %vm1584, %v1608, %v1418
    %v1633 = vsel %vm1585, %v1609, %v1421
    %v1634 = vsel %vm1586, %v1610, %v1426
    %v1635 = vsel %vm1587, %v1611, %v1429
    %v1636 = vsel %vm1588, %v1612, %v1434
    %v1637 = vsel %vm1589, %v1613, %v1437
    %v1638 = vsel %vm1590, %v1614, %v1442
    %v1639 = vsel %vm1591, %v1615, %v1445
    %v1640 = vsel %vm1592, %v1616, %v1450
    %v1641 = vsel %vm1593, %v1617, %v1453
    %v1642 = vsel %vm1594, %v1618, %v1458
    %v1643 = vsel %vm1595, %v1619, %v1461
    %v1644 = vsel %vm1596, %v1620, %v1466
    %v1645 = vsel %vm1597, %v1621, %v1469
    %v1646 = vsel %vm1598, %v1622, %v1474
    %v1647 = vsel %vm1599, %v1623, %v1477
    %v1648 = vmul.f32 %v1624, %v1624
    %v1649 = vmul.f32 %v1625, %v1625
    %v1650 = vmul.f32 %v1626, %v1626
    %v1651 = vmul.f32 %v1627, %v1627
    %v1652 = vmul.f32 %v1628, %v1628
    %v1653 = vmul.f32 %v1629, %v1629
    %v1654 = vmul.f32 %v1630, %v1630
    %v1655 = vmul.f32 %v1631, %v1631
    %v1656 = vmul.f32 %v1632, %v1632
    %v1657 = vmul.f32 %v1633, %v1633
    %v1658 = vmul.f32 %v1634, %v1634
    %v1659 = vmul.f32 %v1635, %v1635
    %v1660 = vmul.f32 %v1636, %v1636
    %v1661 = vmul.f32 %v1637, %v1637
    %v1662 = vmul.f32 %v1638, %v1638
    %v1663 = vmul.f32 %v1639, %v1639
    %v1664 = vmul.f32 %v1640, %v1640
    %v1665 = vmul.f32 %v1641, %v1641
    %v1666 = vmul.f32 %v1642, %v1642
    %v1667 = vmul.f32 %v1643, %v1643
    %v1668 = vmul.f32 %v1644, %v1644
    %v1669 = vmul.f32 %v1645, %v1645
    %v1670 = vmul.f32 %v1646, %v1646
    %v1671 = vmul.f32 %v1647, %v1647
    // Predicated region
    $region34: #{tpu_custom_call.1} parent=1 // pred_check
      %p1672 = pneg %p841
    $region35: #{tpu_custom_call.1} parent=1 // pred_check_branch
      %1674 = sbr.rel (%p1672) target = $region37
    $region36: #{tpu_custom_call.1} parent=1 // pred_region
      %v1675 = vld [vmem:[#allocation2 + $0xc0] sm:$0xff]
      %v1676 = vld [vmem:[#allocation2 + $0xc8] sm:$0xff]
      %v1677 = vld [vmem:[#allocation2 + $0xd0] sm:$0xff]
      %v1678 = vld [vmem:[#allocation2 + $0xd8] sm:$0xff]
      %v1679 = vld [vmem:[#allocation2 + $0xe0] sm:$0xff]
      %v1680 = vld [vmem:[#allocation2 + $0xe8] sm:$0xff]
      %v1681 = vld [vmem:[#allocation2 + $0xf0] sm:$0xff]
      %v1682 = vld [vmem:[#allocation2 + $0xf8] sm:$0xff]
      %v1683 = vld [vmem:[#allocation2 + $0x100] sm:$0xff]
      %v1684 = vld [vmem:[#allocation2 + $0x108] sm:$0xff]
      %v1685 = vld [vmem:[#allocation2 + $0x110] sm:$0xff]
      %v1686 = vld [vmem:[#allocation2 + $0x118] sm:$0xff]
      %v1687 = vld [vmem:[#allocation2 + $0x120] sm:$0xff]
      %v1688 = vld [vmem:[#allocation2 + $0x128] sm:$0xff]
      %v1689 = vld [vmem:[#allocation2 + $0x130] sm:$0xff]
      %v1690 = vld [vmem:[#allocation2 + $0x138] sm:$0xff]
      %v1691 = vld [vmem:[#allocation2 + $0x140] sm:$0xff]
      %v1692 = vld [vmem:[#allocation2 + $0x148] sm:$0xff]
      %v1693 = vld [vmem:[#allocation2 + $0x150] sm:$0xff]
      %v1694 = vld [vmem:[#allocation2 + $0x158] sm:$0xff]
      %v1695 = vld [vmem:[#allocation2 + $0x160] sm:$0xff]
      %v1696 = vld [vmem:[#allocation2 + $0x168] sm:$0xff]
      %v1697 = vld [vmem:[#allocation2 + $0x170] sm:$0xff]
      %v1698 = vld [vmem:[#allocation2 + $0x178] sm:$0xff]
      %v1699 = vadd.f32 %v1675, %v1648
      %v1700 = vadd.f32 %v1676, %v1649
      %v1701 = vadd.f32 %v1677, %v1650
      %v1702 = vadd.f32 %v1678, %v1651
      %v1703 = vadd.f32 %v1679, %v1652
      %v1704 = vadd.f32 %v1680, %v1653
      %v1705 = vadd.f32 %v1681, %v1654
      %v1706 = vadd.f32 %v1682, %v1655
      %v1707 = vadd.f32 %v1683, %v1656
      %v1708 = vadd.f32 %v1684, %v1657
      %v1709 = vadd.f32 %v1685, %v1658
      %v1710 = vadd.f32 %v1686, %v1659
      %v1711 = vadd.f32 %v1687, %v1660
      %v1712 = vadd.f32 %v1688, %v1661
      %v1713 = vadd.f32 %v1689, %v1662
      %v1714 = vadd.f32 %v1690, %v1663
      %v1715 = vadd.f32 %v1691, %v1664
      %v1716 = vadd.f32 %v1692, %v1665
      %v1717 = vadd.f32 %v1693, %v1666
      %v1718 = vadd.f32 %v1694, %v1667
      %v1719 = vadd.f32 %v1695, %v1668
      %v1720 = vadd.f32 %v1696, %v1669
      %v1721 = vadd.f32 %v1697, %v1670
      %v1722 = vadd.f32 %v1698, %v1671
      %1723 = vst [vmem:[#allocation2 + $0xc0] sm:$0xff] %v1699
      %1724 = vst [vmem:[#allocation2 + $0xc8] sm:$0xff] %v1700
      %1725 = vst [vmem:[#allocation2 + $0xd0] sm:$0xff] %v1701
      %1726 = vst [vmem:[#allocation2 + $0xd8] sm:$0xff] %v1702
      %1727 = vst [vmem:[#allocation2 + $0xe0] sm:$0xff] %v1703
      %1728 = vst [vmem:[#allocation2 + $0xe8] sm:$0xff] %v1704
      %1729 = vst [vmem:[#allocation2 + $0xf0] sm:$0xff] %v1705
      %1730 = vst [vmem:[#allocation2 + $0xf8] sm:$0xff] %v1706
      %1731 = vst [vmem:[#allocation2 + $0x100] sm:$0xff] %v1707
      %1732 = vst [vmem:[#allocation2 + $0x108] sm:$0xff] %v1708
      %1733 = vst [vmem:[#allocation2 + $0x110] sm:$0xff] %v1709
      %1734 = vst [vmem:[#allocation2 + $0x118] sm:$0xff] %v1710
      %1735 = vst [vmem:[#allocation2 + $0x120] sm:$0xff] %v1711
      %1736 = vst [vmem:[#allocation2 + $0x128] sm:$0xff] %v1712
      %1737 = vst [vmem:[#allocation2 + $0x130] sm:$0xff] %v1713
      %1738 = vst [vmem:[#allocation2 + $0x138] sm:$0xff] %v1714
      %1739 = vst [vmem:[#allocation2 + $0x140] sm:$0xff] %v1715
      %1740 = vst [vmem:[#allocation2 + $0x148] sm:$0xff] %v1716
      %1741 = vst [vmem:[#allocation2 + $0x150] sm:$0xff] %v1717
      %1742 = vst [vmem:[#allocation2 + $0x158] sm:$0xff] %v1718
      %1743 = vst [vmem:[#allocation2 + $0x160] sm:$0xff] %v1719
      %1744 = vst [vmem:[#allocation2 + $0x168] sm:$0xff] %v1720
      %1745 = vst [vmem:[#allocation2 + $0x170] sm:$0xff] %v1721
      %1746 = vst [vmem:[#allocation2 + $0x178] sm:$0xff] %v1722
    $region37: #{tpu_custom_call.1} parent=1 // pred_fallthru
      _
    // Predicated region
    $region38: #{tpu_custom_call.1} parent=1 // pred_check
      %p1747 = pneg %p154
    $region39: #{tpu_custom_call.1} parent=1 // pred_check_branch
      %1749 = sbr.rel (%p1747) target = $region41
    $region40: #{tpu_custom_call.1} parent=1 // pred_region
      %s1750 = sadd.s32 %s152, 192
      %v1751 = vlaneseq
      %v1752 = vshrl.u32 %v1751, 7
      %v1753 = vadd.s32 %v1752, 8
      %v1754 = vadd.s32 %v1752, 16
      %v1755 = vadd.s32 %v1752, 24
      %v1756 = vadd.s32 %v1752, 32
      %v1757 = vadd.s32 %v1752, 40
      %v1758 = vadd.s32 %v1752, 48
      %v1759 = vadd.s32 %v1752, 56
      %v1760 = vadd.s32 %v1752, 64
      %v1761 = vadd.s32 %v1752, 72
      %v1762 = vadd.s32 %v1752, 80
      %v1763 = vadd.s32 %v1752, 88
      %v1764 = vadd.s32 %v1752, 96
      %v1765 = vadd.s32 %v1752, 104
      %v1766 = vadd.s32 %v1752, 112
      %v1767 = vadd.s32 %v1752, 120
      %v1768 = vadd.s32 %v1752, 128
      %v1769 = vadd.s32 %v1752, 136
      %v1770 = vadd.s32 %v1752, 144
      %v1771 = vadd.s32 %v1752, 152
      %v1772 = vadd.s32 %v1752, 160
      %v1773 = vadd.s32 %v1752, 168
      %v1774 = vadd.s32 %v1752, 176
      %v1775 = vadd.s32 %v1752, 184
      %v1776 = vstv %s1750
      %v1777 = vadd.s32 %v1776, %v1752
      %v1778 = vadd.s32 %v1776, %v1753
      %v1779 = vadd.s32 %v1776, %v1754
      %v1780 = vadd.s32 %v1776, %v1755
      %v1781 = vadd.s32 %v1776, %v1756
      %v1782 = vadd.s32 %v1776, %v1757
      %v1783 = vadd.s32 %v1776, %v1758
      %v1784 = vadd.s32 %v1776, %v1759
      %v1785 = vadd.s32 %v1776, %v1760
      %v1786 = vadd.s32 %v1776, %v1761
      %v1787 = vadd.s32 %v1776, %v1762
      %v1788 = vadd.s32 %v1776, %v1763
      %v1789 = vadd.s32 %v1776, %v1764
      %v1790 = vadd.s32 %v1776, %v1765
      %v1791 = vadd.s32 %v1776, %v1766
      %v1792 = vadd.s32 %v1776, %v1767
      %v1793 = vadd.s32 %v1776, %v1768
      %v1794 = vadd.s32 %v1776, %v1769
      %v1795 = vadd.s32 %v1776, %v1770
      %v1796 = vadd.s32 %v1776, %v1771
      %v1797 = vadd.s32 %v1776, %v1772
      %v1798 = vadd.s32 %v1776, %v1773
      %v1799 = vadd.s32 %v1776, %v1774
      %v1800 = vadd.s32 %v1776, %v1775
      %v1801 = vld [vmem:[#allocation2 + $0xc0] sm:$0xff]
      %v1802 = vld [vmem:[#allocation2 + $0xc8] sm:$0xff]
      %v1803 = vld [vmem:[#allocation2 + $0xd0] sm:$0xff]
      %v1804 = vld [vmem:[#allocation2 + $0xd8] sm:$0xff]
      %v1805 = vld [vmem:[#allocation2 + $0xe0] sm:$0xff]
      %v1806 = vld [vmem:[#allocation2 + $0xe8] sm:$0xff]
      %v1807 = vld [vmem:[#allocation2 + $0xf0] sm:$0xff]
      %v1808 = vld [vmem:[#allocation2 + $0xf8] sm:$0xff]
      %v1809 = vld [vmem:[#allocation2 + $0x100] sm:$0xff]
      %v1810 = vld [vmem:[#allocation2 + $0x108] sm:$0xff]
      %v1811 = vld [vmem:[#allocation2 + $0x110] sm:$0xff]
      %v1812 = vld [vmem:[#allocation2 + $0x118] sm:$0xff]
      %v1813 = vld [vmem:[#allocation2 + $0x120] sm:$0xff]
      %v1814 = vld [vmem:[#allocation2 + $0x128] sm:$0xff]
      %v1815 = vld [vmem:[#allocation2 + $0x130] sm:$0xff]
      %v1816 = vld [vmem:[#allocation2 + $0x138] sm:$0xff]
      %v1817 = vld [vmem:[#allocation2 + $0x140] sm:$0xff]
      %v1818 = vld [vmem:[#allocation2 + $0x148] sm:$0xff]
      %v1819 = vld [vmem:[#allocation2 + $0x150] sm:$0xff]
      %v1820 = vld [vmem:[#allocation2 + $0x158] sm:$0xff]
      %v1821 = vld [vmem:[#allocation2 + $0x160] sm:$0xff]
      %v1822 = vld [vmem:[#allocation2 + $0x168] sm:$0xff]
      %v1823 = vld [vmem:[#allocation2 + $0x170] sm:$0xff]
      %v1824 = vld [vmem:[#allocation2 + $0x178] sm:$0xff]
      %vm1825 = vcmp.lt.s32.totalorder %v1777, 300
      %vm1826 = vcmp.lt.s32.totalorder %v1778, 300
      %vm1827 = vcmp.lt.s32.totalorder %v1779, 300
      %vm1828 = vcmp.lt.s32.totalorder %v1780, 300
      %vm1829 = vcmp.lt.s32.totalorder %v1781, 300
      %vm1830 = vcmp.lt.s32.totalorder %v1782, 300
      %vm1831 = vcmp.lt.s32.totalorder %v1783, 300
      %vm1832 = vcmp.lt.s32.totalorder %v1784, 300
      %vm1833 = vcmp.lt.s32.totalorder %v1785, 300
      %vm1834 = vcmp.lt.s32.totalorder %v1786, 300
      %vm1835 = vcmp.lt.s32.totalorder %v1787, 300
      %vm1836 = vcmp.lt.s32.totalorder %v1788, 300
      %vm1837 = vcmp.lt.s32.totalorder %v1789, 300
      %vm1838 = vcmp.lt.s32.totalorder %v1790, 300
      %vm1839 = vcmp.lt.s32.totalorder %v1791, 300
      %vm1840 = vcmp.lt.s32.totalorder %v1792, 300
      %vm1841 = vcmp.lt.s32.totalorder %v1793, 300
      %vm1842 = vcmp.lt.s32.totalorder %v1794, 300
      %vm1843 = vcmp.lt.s32.totalorder %v1795, 300
      %vm1844 = vcmp.lt.s32.totalorder %v1796, 300
      %vm1845 = vcmp.lt.s32.totalorder %v1797, 300
      %vm1846 = vcmp.lt.s32.totalorder %v1798, 300
      %vm1847 = vcmp.lt.s32.totalorder %v1799, 300
      %vm1848 = vcmp.lt.s32.totalorder %v1800, 300
      %v1849 = vsel %vm1825, %v1648, 0.0
      %v1850 = vsel %vm1826, %v1649, 0.0
      %v1851 = vsel %vm1827, %v1650, 0.0
      %v1852 = vsel %vm1828, %v1651, 0.0
      %v1853 = vsel %vm1829, %v1652, 0.0
      %v1854 = vsel %vm1830, %v1653, 0.0
      %v1855 = vsel %vm1831, %v1654, 0.0
      %v1856 = vsel %vm1832, %v1655, 0.0
      %v1857 = vsel %vm1833, %v1656, 0.0
      %v1858 = vsel %vm1834, %v1657, 0.0
      %v1859 = vsel %vm1835, %v1658, 0.0
      %v1860 = vsel %vm1836, %v1659, 0.0
      %v1861 = vsel %vm1837, %v1660, 0.0
      %v1862 = vsel %vm1838, %v1661, 0.0
      %v1863 = vsel %vm1839, %v1662, 0.0
      %v1864 = vsel %vm1840, %v1663, 0.0
      %v1865 = vsel %vm1841, %v1664, 0.0
      %v1866 = vsel %vm1842, %v1665, 0.0
      %v1867 = vsel %vm1843, %v1666, 0.0
      %v1868 = vsel %vm1844, %v1667, 0.0
      %v1869 = vsel %vm1845, %v1668, 0.0
      %v1870 = vsel %vm1846, %v1669, 0.0
      %v1871 = vsel %vm1847, %v1670, 0.0
      %v1872 = vsel %vm1848, %v1671, 0.0
      %v1873 = vadd.f32 %v1801, %v1849
      %v1874 = vadd.f32 %v1802, %v1850
      %v1875 = vadd.f32 %v1803, %v1851
      %v1876 = vadd.f32 %v1804, %v1852
      %v1877 = vadd.f32 %v1805, %v1853
      %v1878 = vadd.f32 %v1806, %v1854
      %v1879 = vadd.f32 %v1807, %v1855
      %v1880 = vadd.f32 %v1808, %v1856
      %v1881 = vadd.f32 %v1809, %v1857
      %v1882 = vadd.f32 %v1810, %v1858
      %v1883 = vadd.f32 %v1811, %v1859
      %v1884 = vadd.f32 %v1812, %v1860
      %v1885 = vadd.f32 %v1813, %v1861
      %v1886 = vadd.f32 %v1814, %v1862
      %v1887 = vadd.f32 %v1815, %v1863
      %v1888 = vadd.f32 %v1816, %v1864
      %v1889 = vadd.f32 %v1817, %v1865
      %v1890 = vadd.f32 %v1818, %v1866
      %v1891 = vadd.f32 %v1819, %v1867
      %v1892 = vadd.f32 %v1820, %v1868
      %v1893 = vadd.f32 %v1821, %v1869
      %v1894 = vadd.f32 %v1822, %v1870
      %v1895 = vadd.f32 %v1823, %v1871
      %v1896 = vadd.f32 %v1824, %v1872
      %1897 = vst [vmem:[#allocation2 + $0xc0] sm:$0xff] %v1873
      %1898 = vst [vmem:[#allocation2 + $0xc8] sm:$0xff] %v1874
      %1899 = vst [vmem:[#allocation2 + $0xd0] sm:$0xff] %v1875
      %1900 = vst [vmem:[#allocation2 + $0xd8] sm:$0xff] %v1876
      %1901 = vst [vmem:[#allocation2 + $0xe0] sm:$0xff] %v1877
      %1902 = vst [vmem:[#allocation2 + $0xe8] sm:$0xff] %v1878
      %1903 = vst [vmem:[#allocation2 + $0xf0] sm:$0xff] %v1879
      %1904 = vst [vmem:[#allocation2 + $0xf8] sm:$0xff] %v1880
      %1905 = vst [vmem:[#allocation2 + $0x100] sm:$0xff] %v1881
      %1906 = vst [vmem:[#allocation2 + $0x108] sm:$0xff] %v1882
      %1907 = vst [vmem:[#allocation2 + $0x110] sm:$0xff] %v1883
      %1908 = vst [vmem:[#allocation2 + $0x118] sm:$0xff] %v1884
      %1909 = vst [vmem:[#allocation2 + $0x120] sm:$0xff] %v1885
      %1910 = vst [vmem:[#allocation2 + $0x128] sm:$0xff] %v1886
      %1911 = vst [vmem:[#allocation2 + $0x130] sm:$0xff] %v1887
      %1912 = vst [vmem:[#allocation2 + $0x138] sm:$0xff] %v1888
      %1913 = vst [vmem:[#allocation2 + $0x140] sm:$0xff] %v1889
      %1914 = vst [vmem:[#allocation2 + $0x148] sm:$0xff] %v1890
      %1915 = vst [vmem:[#allocation2 + $0x150] sm:$0xff] %v1891
      %1916 = vst [vmem:[#allocation2 + $0x158] sm:$0xff] %v1892
      %1917 = vst [vmem:[#allocation2 + $0x160] sm:$0xff] %v1893
      %1918 = vst [vmem:[#allocation2 + $0x168] sm:$0xff] %v1894
      %1919 = vst [vmem:[#allocation2 + $0x170] sm:$0xff] %v1895
      %1920 = vst [vmem:[#allocation2 + $0x178] sm:$0xff] %v1896
    $region41: #{tpu_custom_call.1} parent=1 // pred_fallthru
      _
    // Predicated region
    $region42: #{tpu_custom_call.1} parent=1 // pred_check
      %p1921 = pneg %p66
    $region43: #{tpu_custom_call.1} parent=1 // pred_check_branch
      %1923 = sbr.rel (%p1921) target = $region45
    $region44: #{tpu_custom_call.1} parent=1 // pred_region
      %v1924 = vld [vmem:[#allocation2] sm:$0xff]
      %v1925 = vld [vmem:[#allocation2 + $0x8] sm:$0xff]
      %v1926 = vld [vmem:[#allocation2 + $0x10] sm:$0xff]
      %v1927 = vld [vmem:[#allocation2 + $0x18] sm:$0xff]
      %v1928 = vld [vmem:[#allocation2 + $0x20] sm:$0xff]
      %v1929 = vld [vmem:[#allocation2 + $0x28] sm:$0xff]
      %v1930 = vld [vmem:[#allocation2 + $0x30] sm:$0xff]
      %v1931 = vld [vmem:[#allocation2 + $0x38] sm:$0xff]
      %v1932 = vld [vmem:[#allocation2 + $0x40] sm:$0xff]
      %v1933 = vld [vmem:[#allocation2 + $0x48] sm:$0xff]
      %v1934 = vld [vmem:[#allocation2 + $0x50] sm:$0xff]
      %v1935 = vld [vmem:[#allocation2 + $0x58] sm:$0xff]
      %v1936 = vld [vmem:[#allocation2 + $0x60] sm:$0xff]
      %v1937 = vld [vmem:[#allocation2 + $0x68] sm:$0xff]
      %v1938 = vld [vmem:[#allocation2 + $0x70] sm:$0xff]
      %v1939 = vld [vmem:[#allocation2 + $0x78] sm:$0xff]
      %v1940 = vld [vmem:[#allocation2 + $0x80] sm:$0xff]
      %v1941 = vld [vmem:[#allocation2 + $0x88] sm:$0xff]
      %v1942 = vld [vmem:[#allocation2 + $0x90] sm:$0xff]
      %v1943 = vld [vmem:[#allocation2 + $0x98] sm:$0xff]
      %v1944 = vld [vmem:[#allocation2 + $0xa0] sm:$0xff]
      %v1945 = vld [vmem:[#allocation2 + $0xa8] sm:$0xff]
      %v1946 = vld [vmem:[#allocation2 + $0xb0] sm:$0xff]
      %v1947 = vld [vmem:[#allocation2 + $0xb8] sm:$0xff]
      %v1948 = vld [vmem:[#allocation2 + $0xc0] sm:$0xff]
      %v1949 = vld [vmem:[#allocation2 + $0xc8] sm:$0xff]
      %v1950 = vld [vmem:[#allocation2 + $0xd0] sm:$0xff]
      %v1951 = vld [vmem:[#allocation2 + $0xd8] sm:$0xff]
      %v1952 = vld [vmem:[#allocation2 + $0xe0] sm:$0xff]
      %v1953 = vld [vmem:[#allocation2 + $0xe8] sm:$0xff]
      %v1954 = vld [vmem:[#allocation2 + $0xf0] sm:$0xff]
      %v1955 = vld [vmem:[#allocation2 + $0xf8] sm:$0xff]
      %v1956 = vld [vmem:[#allocation2 + $0x100] sm:$0xff]
      %v1957 = vld [vmem:[#allocation2 + $0x108] sm:$0xff]
      %v1958 = vld [vmem:[#allocation2 + $0x110] sm:$0xff]
      %v1959 = vld [vmem:[#allocation2 + $0x118] sm:$0xff]
      %v1960 = vld [vmem:[#allocation2 + $0x120] sm:$0xff]
      %v1961 = vld [vmem:[#allocation2 + $0x128] sm:$0xff]
      %v1962 = vld [vmem:[#allocation2 + $0x130] sm:$0xff]
      %v1963 = vld [vmem:[#allocation2 + $0x138] sm:$0xff]
      %v1964 = vld [vmem:[#allocation2 + $0x140] sm:$0xff]
      %v1965 = vld [vmem:[#allocation2 + $0x148] sm:$0xff]
      %v1966 = vld [vmem:[#allocation2 + $0x150] sm:$0xff]
      %v1967 = vld [vmem:[#allocation2 + $0x158] sm:$0xff]
      %v1968 = vld [vmem:[#allocation2 + $0x160] sm:$0xff]
      %v1969 = vld [vmem:[#allocation2 + $0x168] sm:$0xff]
      %v1970 = vld [vmem:[#allocation2 + $0x170] sm:$0xff]
      %v1971 = vld [vmem:[#allocation2 + $0x178] sm:$0xff]
      %v1972 = vadd.f32 %v1924, %v1925
      %v1973 = vadd.f32 %v1972, %v1926
      %v1974 = vadd.f32 %v1973, %v1927
      %v1975 = vadd.f32 %v1974, %v1928
      %v1976 = vadd.f32 %v1975, %v1929
      %v1977 = vadd.f32 %v1976, %v1930
      %v1978 = vadd.f32 %v1977, %v1931
      %v1979 = vadd.f32 %v1978, %v1932
      %v1980 = vadd.f32 %v1979, %v1933
      %v1981 = vadd.f32 %v1980, %v1934
      %v1982 = vadd.f32 %v1981, %v1935
      %v1983 = vadd.f32 %v1982, %v1936
      %v1984 = vadd.f32 %v1983, %v1937
      %v1985 = vadd.f32 %v1984, %v1938
      %v1986 = vadd.f32 %v1985, %v1939
      %v1987 = vadd.f32 %v1986, %v1940
      %v1988 = vadd.f32 %v1987, %v1941
      %v1989 = vadd.f32 %v1988, %v1942
      %v1990 = vadd.f32 %v1989, %v1943
      %v1991 = vadd.f32 %v1990, %v1944
      %v1992 = vadd.f32 %v1991, %v1945
      %v1993 = vadd.f32 %v1992, %v1946
      %v1994 = vadd.f32 %v1993, %v1947
      %v1995 = vadd.f32 %v1994, %v1948
      %v1996 = vadd.f32 %v1995, %v1949
      %v1997 = vadd.f32 %v1996, %v1950
      %v1998 = vadd.f32 %v1997, %v1951
      %v1999 = vadd.f32 %v1998, %v1952
      %v2000 = vadd.f32 %v1999, %v1953
      %v2001 = vadd.f32 %v2000, %v1954
      %v2002 = vadd.f32 %v2001, %v1955
      %v2003 = vadd.f32 %v2002, %v1956
      %v2004 = vadd.f32 %v2003, %v1957
      %v2005 = vadd.f32 %v2004, %v1958
      %v2006 = vadd.f32 %v2005, %v1959
      %v2007 = vadd.f32 %v2006, %v1960
      %v2008 = vadd.f32 %v2007, %v1961
      %v2009 = vadd.f32 %v2008, %v1962
      %v2010 = vadd.f32 %v2009, %v1963
      %v2011 = vadd.f32 %v2010, %v1964
      %v2012 = vadd.f32 %v2011, %v1965
      %v2013 = vadd.f32 %v2012, %v1966
      %v2014 = vadd.f32 %v2013, %v1967
      %v2015 = vadd.f32 %v2014, %v1968
      %v2016 = vadd.f32 %v2015, %v1969
      %v2017 = vadd.f32 %v2016, %v1970
      %v2018 = vadd.f32 %v2017, %v1971
      %v2019 = vrot.slane %v2018, 4
      %v2020 = vadd.f32 %v2018, %v2019
      %v2021 = vrot.slane %v2020, 2
      %v2022 = vadd.f32 %v2020, %v2021
      %v2023 = vrot.slane %v2022, 1
      %v2024 = vadd.f32 %v2022, %v2023
      %2025 = vst [vmem:[#allocation3] sm:$0x1] %v2024
    $region45: #{tpu_custom_call.1} parent=1 // pred_fallthru
      _
    // Predicated region
    $region46: #{tpu_custom_call.1} parent=1 // pred_check
      _
    $region47: #{tpu_custom_call.1} parent=1 // pred_check_branch
      %2027 = sbr.rel (0) target = $region49
    $region48: #{tpu_custom_call.1} parent=1 // pred_region
      %s2029 = ssub.s32 16, 16
      %2030 = vsyncadd [#allocation4], %s2029
      %s2032 = sshll.u32 [#allocation3], 4
      %s2033 = int_to_ptr.vmem [resolvable:$true] %s2032
      %2035 = dma.vmem_to_hbm [thread:$0]  %s2033, 16, %s5, [#allocation4]
    $region49: #{tpu_custom_call.1} parent=1 // pred_fallthru
      _
    // Predicated region
    $region50: #{tpu_custom_call.1} parent=1 // pred_check
      _
    $region51: #{tpu_custom_call.1} parent=1 // pred_check_branch
      %2037 = sbr.rel (0) target = $region53
    $region52: #{tpu_custom_call.1} parent=1 // pred_region
      %2038 = dma.done [#allocation4], 16
    $region53: #{tpu_custom_call.1} parent=1 // pred_fallthru
      _
    %2039 = vsyncpa [#allocation4], 1

</llo_original>
